<compile_context>
chip_gen: v6e
topology: v6e:2x2x1
jax: 0.10.0
libtpu: 0.0.40
codegen_flags: <defaults>
</compile_context>

<pallas_src>
import functools

import jax
import jax.numpy as jnp
from jax.experimental import pallas as pl
from jax.experimental.pallas import tpu as pltpu

_LANE = 128


def _round_up(x, m):
    return (x + m - 1) // m * m


# ----------------------------------------------------------------------------
# Fused Pallas kernel: one (batch, row-tile) step
#   feat = relu( sum_{kh,kw} shift(x) @ Wbb[kh,kw] + bbb )   (f32 accumulate)
#   out  = feat_bf16 @ Wh + bh                               (cls | box heads)
# ----------------------------------------------------------------------------
def _fused_det_kernel(a_main_ref, a_hal0_ref, a_hal1_ref,
                      wbb_ref, bbb_ref, wh_ref, bh_ref, o_ref):
    # a_main_ref: (1, th, W+2, C) bf16   padded-activation rows [ht*th, ht*th+th)
    # a_hal0/1:   (1, 1,  W+2, C) bf16   halo rows ht*th+th and ht*th+th+1
    # wbb_ref:    (9, C, Hp)      bf16   backbone weight per tap (resident)
    # bbb_ref:    (1, Hp)         f32    backbone bias
    # wh_ref:     (Hp, Np)        bf16   concatenated [cls | box] head weight
    # bh_ref:     (1, Np)         f32    concatenated head bias
    # o_ref:      (th*W, Np)      f32    concatenated head output tile
    th = a_main_ref.shape[1]
    wp2 = a_main_ref.shape[2]
    c = a_main_ref.shape[3]
    w = wp2 - 2
    hp = wbb_ref.shape[2]

    # (th+2, W+2, C) window assembled in VMEM (main tile + 2 halo rows).
    xwin = jnp.concatenate(
        [a_main_ref[0], a_hal0_ref[0], a_hal1_ref[0]], axis=0)

    # In-VMEM "virtual im2col": 9 shifted taps, each a small GEMM, f32 acc.
    feat = jnp.zeros((th * w, hp), dtype=jnp.float32)
    for kh in range(3):
        for kw in range(3):
            tap = xwin[kh:kh + th, kw:kw + w, :].reshape(th * w, c)
            feat = feat + jnp.dot(tap, wbb_ref[kh * 3 + kw],
                                  preferred_element_type=jnp.float32)

    feat = jnp.maximum(feat + bbb_ref[...], 0.0)          # bias + ReLU in f32
    heads = jnp.dot(feat.astype(jnp.bfloat16), wh_ref[...],
                    preferred_element_type=jnp.float32)
    o_ref[...] = (heads + bh_ref[...]).astype(o_ref.dtype)


# ----------------------------------------------------------------------------
# Tiling / VMEM heuristics (generation-conservative: fits v7x, fine on v5e/v6e)
# ----------------------------------------------------------------------------
def _working_set_bytes(th, W, C, Hp, Np):
    tm = th * W
    act = 2 * th * (W + 2) * C * 2 + 2 * 2 * (W + 2) * C * 2   # dbl-buf A + halos (bf16)
    wts = 9 * C * Hp * 2 + Hp * Np * 2 + (Hp + Np) * 4          # single-buffered residents
    out = 2 * tm * Np * 4                                       # dbl-buf f32 output
    inter = tm * (C * 2 + Hp * 4 + Hp * 2 + Np * 4)             # tap / feat / heads values
    return act + wts + out + inter


def _choose_tile_rows(B, H, W, C, Hp, Np):
    """Rows of the image per grid step. Must divide H, keep (th*W) % 8 == 0,
    fit a conservative VMEM budget, and leave >= 4 grid steps when possible."""
    budget = 24 * 1024 * 1024
    divisors = [d for d in range(1, H + 1) if H % d == 0 and (d * W) % 8 == 0]
    if not divisors:
        raise ValueError(f"no row tile with (rows*W) % 8 == 0 for H={H}, W={W}")
    th = divisors[0]
    for d in divisors:
        if d * W <= 2048 and _working_set_bytes(d, W, C, Hp, Np) <= budget:
            th = d
    while B * (H // th) < 4:                       # give both v7x TCs pipelined work
        smaller = [d for d in divisors if d < th and d * W >= 64]
        if not smaller:
            break
        th = smaller[-1]
    return th


def _vmem_limit_bytes(th, W, C, Hp, Np):
    need = _working_set_bytes(th, W, C, Hp, Np)
    return int(min(48 * 1024 * 1024, max(32 * 1024 * 1024, 2 * need)))


# ----------------------------------------------------------------------------
# One-time weight re-layout (hoisted out of the per-call forward)
# ----------------------------------------------------------------------------
def prepare_params(params):
    hidden = int(params["backbone_b"].shape[0])
    c_in = int(params["backbone_w"].shape[1])
    n_cls = int(params["cls_b"].shape[0])
    n_box = int(params["box_b"].shape[0])
    hp = _round_up(hidden, _LANE)
    np_ = _round_up(n_cls + n_box, _LANE)

    # backbone: torch (OC, IC, kh, kw) -> (kh, kw, IC, OC) -> (9, IC, Hp) bf16
    w_bb = jnp.transpose(params["backbone_w"], (2, 3, 1, 0)).reshape(9, c_in, hidden)
    w_bb = jnp.pad(w_bb, ((0, 0), (0, 0), (0, hp - hidden))).astype(jnp.bfloat16)
    b_bb = jnp.pad(params["backbone_b"], (0, hp - hidden)
                   ).reshape(1, hp).astype(jnp.float32)

    # heads: torch (OC, hidden, 1, 1) -> (hidden, OC); concat cls & box along OC
    w_cls = jnp.transpose(params["cls_w"].reshape(n_cls, hidden), (1, 0))
    w_box = jnp.transpose(params["box_w"].reshape(n_box, hidden), (1, 0))
    w_h = jnp.concatenate([w_cls, w_box], axis=1)
    w_h = jnp.pad(w_h, ((0, hp - hidden), (0, np_ - (n_cls + n_box)))
                  ).astype(jnp.bfloat16)
    b_h = jnp.pad(jnp.concatenate([params["cls_b"], params["box_b"]]),
                  (0, np_ - (n_cls + n_box))).reshape(1, np_).astype(jnp.float32)
    return {"w_bb": w_bb, "b_bb": b_bb, "w_h": w_h, "b_h": b_h}


# ----------------------------------------------------------------------------
# Forward (NHWC in, NHWC out)
# ----------------------------------------------------------------------------
def object_detection_forward(x_nhwc, prep, *, n_cls, n_box):
    """x_nhwc: (B, H, W, C) float32 -> (cls: (B,H,W,n_cls), box: (B,H,W,n_box))."""
    B, H, W, C = x_nhwc.shape
    w_bb, b_bb = prep["w_bb"], prep["b_bb"]
    w_h, b_h = prep["w_h"], prep["b_h"]
    Hp = int(w_bb.shape[2])
    Np = int(w_h.shape[1])
    assert int(w_bb.shape[1]) == C, "channel mismatch between input and weights"

    # Spatial zero-pad (conv padding=1) + bf16 cast; the only activation copy.
    xp = jnp.pad(x_nhwc.astype(jnp.bfloat16), ((0, 0), (1, 1), (1, 1), (0, 0)))

    th = _choose_tile_rows(B, H, W, C, Hp, Np)
    Ht = H // th
    tm = th * W

    resident = dict(pipeline_mode=pl.Buffered(1))   # constant index_map -> 1 buffer

    out = pl.pallas_call(
        _fused_det_kernel,
        out_shape=jax.ShapeDtypeStruct((B * H * W, Np), jnp.float32),
        grid_spec=pltpu.PrefetchScalarGridSpec(
            num_scalar_prefetch=0,
            grid=(B, Ht),
            in_specs=[
                # main row tile of the padded activation: rows [ht*th, ht*th+th)
                pl.BlockSpec((1, th, W + 2, C), lambda b, ht: (b, ht, 0, 0)),
                # two halo rows below the tile (block size 1 -> element index)
                pl.BlockSpec((1, 1, W + 2, C),
                             lambda b, ht: (b, (ht + 1) * th, 0, 0)),
                pl.BlockSpec((1, 1, W + 2, C),
                             lambda b, ht: (b, (ht + 1) * th + 1, 0, 0)),
                # resident weights / biases (fetched once, single-buffered)
                pl.BlockSpec((9, C, Hp), lambda b, ht: (0, 0, 0), **resident),
                pl.BlockSpec((1, Hp), lambda b, ht: (0, 0), **resident),
                pl.BlockSpec((Hp, Np), lambda b, ht: (0, 0), **resident),
                pl.BlockSpec((1, Np), lambda b, ht: (0, 0), **resident),
            ],
            out_specs=pl.BlockSpec((tm, Np), lambda b, ht: (b * Ht + ht, 0)),
        ),
        compiler_params=pltpu.CompilerParams(
            dimension_semantics=("parallel", "parallel"),
            vmem_limit_bytes=_vmem_limit_bytes(th, W, C, Hp, Np)),
    )(xp, xp, xp, w_bb, b_bb, w_h, b_h)

    cls = out[:, :n_cls].reshape(B, H, W, n_cls)
    box = out[:, n_cls:n_cls + n_box].reshape(B, H, W, n_box)
    return cls, box


# ----------------------------------------------------------------------------
# Deterministic parameter init (torch conv layout) + pure-JAX f32 reference
# ----------------------------------------------------------------------------
def init_params(key, c_in, hidden, num_anchors, num_classes):
    ks = jax.random.split(key, 6)
    scale = 0.05
    return {
        # torch nn.Conv2d weight layout: (out_ch, in_ch, kh, kw)
        "backbone_w": scale * jax.random.normal(ks[0], (hidden, c_in, 3, 3), jnp.float32),
        "backbone_b": scale * jax.random.normal(ks[1], (hidden,), jnp.float32),
        "cls_w": scale * jax.random.normal(ks[2], (num_anchors * num_classes, hidden, 1, 1), jnp.float32),
        "cls_b": scale * jax.random.normal(ks[3], (num_anchors * num_classes,), jnp.float32),
        "box_w": scale * jax.random.normal(ks[4], (num_anchors * 4, hidden, 1, 1), jnp.float32),
        "box_b": scale * jax.random.normal(ks[5], (num_anchors * 4,), jnp.float32),
    }


def _reference_forward(x_nhwc, params):
    w = jnp.transpose(params["backbone_w"], (2, 3, 1, 0))        # (kh, kw, IC, OC)
    feat = jax.lax.conv_general_dilated(
        x_nhwc, w, window_strides=(1, 1), padding="SAME",
        dimension_numbers=("NHWC", "HWIO", "NHWC"),
        precision=jax.lax.Precision.HIGHEST)
    feat = jnp.maximum(feat + params["backbone_b"], 0.0)
    hid = feat.shape[-1]
    cls = jnp.einsum("bhwc,oc->bhwo", feat, params["cls_w"].reshape(-1, hid),
                     precision=jax.lax.Precision.HIGHEST) + params["cls_b"]
    box = jnp.einsum("bhwc,oc->bhwo", feat, params["box_w"].reshape(-1, hid),
                     precision=jax.lax.Precision.HIGHEST) + params["box_b"]
    return cls, box


if __name__ == "__main__":
    B, C, H, W = 2, 4, 16, 16
    HIDDEN, NUM_ANCHORS, NUM_CLASSES = 32, 3, 5
    n_cls = NUM_ANCHORS * NUM_CLASSES
    n_box = NUM_ANCHORS * 4

    key = jax.random.PRNGKey(0)
    k_x, k_p = jax.random.split(key)
    x = jax.random.normal(k_x, (B, H, W, C), jnp.float32)        # NHWC input
    params = init_params(k_p, C, HIDDEN, NUM_ANCHORS, NUM_CLASSES)

    prep = prepare_params(params)                                # hoisted, done once
    fwd = jax.jit(functools.partial(object_detection_forward,
                                    n_cls=n_cls, n_box=n_box))

    cls_logits, box_deltas = fwd(x, prep)
    jax.block_until_ready((cls_logits, box_deltas))

    assert cls_logits.shape == (B, H, W, n_cls), cls_logits.shape
    assert box_deltas.shape == (B, H, W, n_box), box_deltas.shape
    assert bool(jnp.all(jnp.isfinite(cls_logits))) and bool(jnp.all(jnp.isfinite(box_deltas)))

    # Correctness vs a pure-JAX f32 reference (kernel uses bf16 MXU inputs,
    # so a loose tolerance is expected and documented).
    ref_cls, ref_box = _reference_forward(x, params)
    assert bool(jnp.max(jnp.abs(cls_logits - ref_cls)) < 3e-2)
    assert bool(jnp.max(jnp.abs(box_deltas - ref_box)) < 3e-2)

    print("KERNEL_OK")
</pallas_src>

<mosaic_0001>
module attributes {stable_mosaic.version = 11 : i64} {
  func.func @_fused_det_kernel(%arg0: i32, %arg1: i32, %arg2: memref<1x8x18x4xbf16, #tpu.memory_space<vmem>>, %arg3: memref<1x1x18x4xbf16, #tpu.memory_space<vmem>>, %arg4: memref<1x1x18x4xbf16, #tpu.memory_space<vmem>>, %arg5: memref<9x4x128xbf16, #tpu.memory_space<vmem>>, %arg6: memref<1x128xf32, #tpu.memory_space<vmem>>, %arg7: memref<128x128xbf16, #tpu.memory_space<vmem>>, %arg8: memref<1x128xf32, #tpu.memory_space<vmem>>, %arg9: memref<128x128xf32, #tpu.memory_space<vmem>>) attributes {dimension_semantics = [#tpu.dimension_semantics<parallel>, #tpu.dimension_semantics<parallel>], iteration_bounds = array<i64: 2, 2>, scalar_prefetch = 0 : i64, scratch_operands = 0 : i64, tpu.core_type = #tpu.core_type<tc>, window_params = [{transform_indices = @transform_0, window_bounds = array<i64: 1, 8, 18, 4>}, {transform_indices = @transform_1, window_bounds = array<i64: 1, 1, 18, 4>}, {transform_indices = @transform_2, window_bounds = array<i64: 1, 1, 18, 4>}, {pipeline_mode = #tpu.pipeline_mode<synchronous>, transform_indices = @transform_3, window_bounds = array<i64: 9, 4, 128>}, {pipeline_mode = #tpu.pipeline_mode<synchronous>, transform_indices = @transform_4, window_bounds = array<i64: 1, 128>}, {pipeline_mode = #tpu.pipeline_mode<synchronous>, transform_indices = @transform_5, window_bounds = array<i64: 128, 128>}, {pipeline_mode = #tpu.pipeline_mode<synchronous>, transform_indices = @transform_6, window_bounds = array<i64: 1, 128>}, {transform_indices = @transform_7, window_bounds = array<i64: 128, 128>}]} {
    %c0 = arith.constant 0 : index
    %c0_0 = arith.constant 0 : index
    %c0_1 = arith.constant 0 : index
    %c0_2 = arith.constant 0 : index
    %0 = vector.load %arg2[%c0, %c0_0, %c0_1, %c0_2] : memref<1x8x18x4xbf16, #tpu.memory_space<vmem>>, vector<1x8x18x4xbf16>
    %1 = vector.shape_cast %0 : vector<1x8x18x4xbf16> to vector<8x18x4xbf16>
    %c0_3 = arith.constant 0 : index
    %c0_4 = arith.constant 0 : index
    %c0_5 = arith.constant 0 : index
    %c0_6 = arith.constant 0 : index
    %2 = vector.load %arg3[%c0_3, %c0_4, %c0_5, %c0_6] : memref<1x1x18x4xbf16, #tpu.memory_space<vmem>>, vector<1x1x18x4xbf16>
    %3 = vector.shape_cast %2 : vector<1x1x18x4xbf16> to vector<1x18x4xbf16>
    %c0_7 = arith.constant 0 : index
    %c0_8 = arith.constant 0 : index
    %c0_9 = arith.constant 0 : index
    %c0_10 = arith.constant 0 : index
    %4 = vector.load %arg4[%c0_7, %c0_8, %c0_9, %c0_10] : memref<1x1x18x4xbf16, #tpu.memory_space<vmem>>, vector<1x1x18x4xbf16>
    %5 = vector.shape_cast %4 : vector<1x1x18x4xbf16> to vector<1x18x4xbf16>
    %6 = tpu.concatenate %1, %3, %5 in 0 : vector<8x18x4xbf16>, vector<1x18x4xbf16>, vector<1x18x4xbf16> -> vector<10x18x4xbf16>
    %cst = arith.constant 0.000000e+00 : f32
    %7 = vector.broadcast %cst : f32 to vector<128x128xf32>
    %8 = vector.extract_strided_slice %6 {offsets = [0, 0, 0], sizes = [8, 16, 4], strides = [1, 1, 1]} : vector<10x18x4xbf16> to vector<8x16x4xbf16>
    %9 = vector.shape_cast %8 : vector<8x16x4xbf16> to vector<128x4xbf16>
    %c0_11 = arith.constant 0 : index
    %c0_12 = arith.constant 0 : index
    %c0_13 = arith.constant 0 : index
    %10 = vector.load %arg5[%c0_11, %c0_12, %c0_13] : memref<9x4x128xbf16, #tpu.memory_space<vmem>>, vector<1x4x128xbf16>
    %11 = vector.shape_cast %10 : vector<1x4x128xbf16> to vector<4x128xbf16>
    %cst_14 = arith.constant dense<0.000000e+00> : vector<128x128xf32>
    %12 = tpu.matmul %9, %11, %cst_14 {dimension_numbers = #tpu.dot_dimension_numbers<[1], [0], [0], [1], [0, 0, 1, 1], [], []>} : vector<128x4xbf16>, vector<4x128xbf16>, vector<128x128xf32> -> vector<128x128xf32>
    %13 = arith.addf %7, %12 : vector<128x128xf32>
    %14 = vector.extract_strided_slice %6 {offsets = [0, 1, 0], sizes = [8, 16, 4], strides = [1, 1, 1]} : vector<10x18x4xbf16> to vector<8x16x4xbf16>
    %15 = vector.shape_cast %14 : vector<8x16x4xbf16> to vector<128x4xbf16>
    %c1 = arith.constant 1 : index
    %c0_15 = arith.constant 0 : index
    %c0_16 = arith.constant 0 : index
    %16 = vector.load %arg5[%c1, %c0_15, %c0_16] : memref<9x4x128xbf16, #tpu.memory_space<vmem>>, vector<1x4x128xbf16>
    %17 = vector.shape_cast %16 : vector<1x4x128xbf16> to vector<4x128xbf16>
    %cst_17 = arith.constant dense<0.000000e+00> : vector<128x128xf32>
    %18 = tpu.matmul %15, %17, %cst_17 {dimension_numbers = #tpu.dot_dimension_numbers<[1], [0], [0], [1], [0, 0, 1, 1], [], []>} : vector<128x4xbf16>, vector<4x128xbf16>, vector<128x128xf32> -> vector<128x128xf32>
    %19 = arith.addf %13, %18 : vector<128x128xf32>
    %20 = vector.extract_strided_slice %6 {offsets = [0, 2, 0], sizes = [8, 16, 4], strides = [1, 1, 1]} : vector<10x18x4xbf16> to vector<8x16x4xbf16>
    %21 = vector.shape_cast %20 : vector<8x16x4xbf16> to vector<128x4xbf16>
    %c2 = arith.constant 2 : index
    %c0_18 = arith.constant 0 : index
    %c0_19 = arith.constant 0 : index
    %22 = vector.load %arg5[%c2, %c0_18, %c0_19] : memref<9x4x128xbf16, #tpu.memory_space<vmem>>, vector<1x4x128xbf16>
    %23 = vector.shape_cast %22 : vector<1x4x128xbf16> to vector<4x128xbf16>
    %cst_20 = arith.constant dense<0.000000e+00> : vector<128x128xf32>
    %24 = tpu.matmul %21, %23, %cst_20 {dimension_numbers = #tpu.dot_dimension_numbers<[1], [0], [0], [1], [0, 0, 1, 1], [], []>} : vector<128x4xbf16>, vector<4x128xbf16>, vector<128x128xf32> -> vector<128x128xf32>
    %25 = arith.addf %19, %24 : vector<128x128xf32>
    %26 = vector.extract_strided_slice %6 {offsets = [1, 0, 0], sizes = [8, 16, 4], strides = [1, 1, 1]} : vector<10x18x4xbf16> to vector<8x16x4xbf16>
    %27 = vector.shape_cast %26 : vector<8x16x4xbf16> to vector<128x4xbf16>
    %c3 = arith.constant 3 : index
    %c0_21 = arith.constant 0 : index
    %c0_22 = arith.constant 0 : index
    %28 = vector.load %arg5[%c3, %c0_21, %c0_22] : memref<9x4x128xbf16, #tpu.memory_space<vmem>>, vector<1x4x128xbf16>
    %29 = vector.shape_cast %28 : vector<1x4x128xbf16> to vector<4x128xbf16>
    %cst_23 = arith.constant dense<0.000000e+00> : vector<128x128xf32>
    %30 = tpu.matmul %27, %29, %cst_23 {dimension_numbers = #tpu.dot_dimension_numbers<[1], [0], [0], [1], [0, 0, 1, 1], [], []>} : vector<128x4xbf16>, vector<4x128xbf16>, vector<128x128xf32> -> vector<128x128xf32>
    %31 = arith.addf %25, %30 : vector<128x128xf32>
    %32 = vector.extract_strided_slice %6 {offsets = [1, 1, 0], sizes = [8, 16, 4], strides = [1, 1, 1]} : vector<10x18x4xbf16> to vector<8x16x4xbf16>
    %33 = vector.shape_cast %32 : vector<8x16x4xbf16> to vector<128x4xbf16>
    %c4 = arith.constant 4 : index
    %c0_24 = arith.constant 0 : index
    %c0_25 = arith.constant 0 : index
    %34 = vector.load %arg5[%c4, %c0_24, %c0_25] : memref<9x4x128xbf16, #tpu.memory_space<vmem>>, vector<1x4x128xbf16>
    %35 = vector.shape_cast %34 : vector<1x4x128xbf16> to vector<4x128xbf16>
    %cst_26 = arith.constant dense<0.000000e+00> : vector<128x128xf32>
    %36 = tpu.matmul %33, %35, %cst_26 {dimension_numbers = #tpu.dot_dimension_numbers<[1], [0], [0], [1], [0, 0, 1, 1], [], []>} : vector<128x4xbf16>, vector<4x128xbf16>, vector<128x128xf32> -> vector<128x128xf32>
    %37 = arith.addf %31, %36 : vector<128x128xf32>
    %38 = vector.extract_strided_slice %6 {offsets = [1, 2, 0], sizes = [8, 16, 4], strides = [1, 1, 1]} : vector<10x18x4xbf16> to vector<8x16x4xbf16>
    %39 = vector.shape_cast %38 : vector<8x16x4xbf16> to vector<128x4xbf16>
    %c5 = arith.constant 5 : index
    %c0_27 = arith.constant 0 : index
    %c0_28 = arith.constant 0 : index
    %40 = vector.load %arg5[%c5, %c0_27, %c0_28] : memref<9x4x128xbf16, #tpu.memory_space<vmem>>, vector<1x4x128xbf16>
    %41 = vector.shape_cast %40 : vector<1x4x128xbf16> to vector<4x128xbf16>
    %cst_29 = arith.constant dense<0.000000e+00> : vector<128x128xf32>
    %42 = tpu.matmul %39, %41, %cst_29 {dimension_numbers = #tpu.dot_dimension_numbers<[1], [0], [0], [1], [0, 0, 1, 1], [], []>} : vector<128x4xbf16>, vector<4x128xbf16>, vector<128x128xf32> -> vector<128x128xf32>
    %43 = arith.addf %37, %42 : vector<128x128xf32>
    %44 = vector.extract_strided_slice %6 {offsets = [2, 0, 0], sizes = [8, 16, 4], strides = [1, 1, 1]} : vector<10x18x4xbf16> to vector<8x16x4xbf16>
    %45 = vector.shape_cast %44 : vector<8x16x4xbf16> to vector<128x4xbf16>
    %c6 = arith.constant 6 : index
    %c0_30 = arith.constant 0 : index
    %c0_31 = arith.constant 0 : index
    %46 = vector.load %arg5[%c6, %c0_30, %c0_31] : memref<9x4x128xbf16, #tpu.memory_space<vmem>>, vector<1x4x128xbf16>
    %47 = vector.shape_cast %46 : vector<1x4x128xbf16> to vector<4x128xbf16>
    %cst_32 = arith.constant dense<0.000000e+00> : vector<128x128xf32>
    %48 = tpu.matmul %45, %47, %cst_32 {dimension_numbers = #tpu.dot_dimension_numbers<[1], [0], [0], [1], [0, 0, 1, 1], [], []>} : vector<128x4xbf16>, vector<4x128xbf16>, vector<128x128xf32> -> vector<128x128xf32>
    %49 = arith.addf %43, %48 : vector<128x128xf32>
    %50 = vector.extract_strided_slice %6 {offsets = [2, 1, 0], sizes = [8, 16, 4], strides = [1, 1, 1]} : vector<10x18x4xbf16> to vector<8x16x4xbf16>
    %51 = vector.shape_cast %50 : vector<8x16x4xbf16> to vector<128x4xbf16>
    %c7 = arith.constant 7 : index
    %c0_33 = arith.constant 0 : index
    %c0_34 = arith.constant 0 : index
    %52 = vector.load %arg5[%c7, %c0_33, %c0_34] : memref<9x4x128xbf16, #tpu.memory_space<vmem>>, vector<1x4x128xbf16>
    %53 = vector.shape_cast %52 : vector<1x4x128xbf16> to vector<4x128xbf16>
    %cst_35 = arith.constant dense<0.000000e+00> : vector<128x128xf32>
    %54 = tpu.matmul %51, %53, %cst_35 {dimension_numbers = #tpu.dot_dimension_numbers<[1], [0], [0], [1], [0, 0, 1, 1], [], []>} : vector<128x4xbf16>, vector<4x128xbf16>, vector<128x128xf32> -> vector<128x128xf32>
    %55 = arith.addf %49, %54 : vector<128x128xf32>
    %56 = vector.extract_strided_slice %6 {offsets = [2, 2, 0], sizes = [8, 16, 4], strides = [1, 1, 1]} : vector<10x18x4xbf16> to vector<8x16x4xbf16>
    %57 = vector.shape_cast %56 : vector<8x16x4xbf16> to vector<128x4xbf16>
    %c8 = arith.constant 8 : index
    %c0_36 = arith.constant 0 : index
    %c0_37 = arith.constant 0 : index
    %58 = vector.load %arg5[%c8, %c0_36, %c0_37] : memref<9x4x128xbf16, #tpu.memory_space<vmem>>, vector<1x4x128xbf16>
    %59 = vector.shape_cast %58 : vector<1x4x128xbf16> to vector<4x128xbf16>
    %cst_38 = arith.constant dense<0.000000e+00> : vector<128x128xf32>
    %60 = tpu.matmul %57, %59, %cst_38 {dimension_numbers = #tpu.dot_dimension_numbers<[1], [0], [0], [1], [0, 0, 1, 1], [], []>} : vector<128x4xbf16>, vector<4x128xbf16>, vector<128x128xf32> -> vector<128x128xf32>
    %61 = arith.addf %55, %60 : vector<128x128xf32>
    %c0_39 = arith.constant 0 : index
    %c0_40 = arith.constant 0 : index
    %62 = vector.load %arg6[%c0_39, %c0_40] : memref<1x128xf32, #tpu.memory_space<vmem>>, vector<1x128xf32>
    %63 = vector.broadcast %62 : vector<1x128xf32> to vector<128x128xf32>
    %64 = arith.addf %61, %63 : vector<128x128xf32>
    %cst_41 = arith.constant 0.000000e+00 : f32
    %65 = vector.broadcast %cst_41 : f32 to vector<128x128xf32>
    %66 = arith.maximumf %64, %65 : vector<128x128xf32>
    %67 = arith.truncf %66 : vector<128x128xf32> to vector<128x128xbf16>
    %c0_42 = arith.constant 0 : index
    %c0_43 = arith.constant 0 : index
    %68 = vector.load %arg7[%c0_42, %c0_43] : memref<128x128xbf16, #tpu.memory_space<vmem>>, vector<128x128xbf16>
    %cst_44 = arith.constant dense<0.000000e+00> : vector<128x128xf32>
    %69 = tpu.matmul %67, %68, %cst_44 {dimension_numbers = #tpu.dot_dimension_numbers<[1], [0], [0], [1], [0, 0, 1, 1], [], []>} : vector<128x128xbf16>, vector<128x128xbf16>, vector<128x128xf32> -> vector<128x128xf32>
    %c0_45 = arith.constant 0 : index
    %c0_46 = arith.constant 0 : index
    %70 = vector.load %arg8[%c0_45, %c0_46] : memref<1x128xf32, #tpu.memory_space<vmem>>, vector<1x128xf32>
    %71 = vector.broadcast %70 : vector<1x128xf32> to vector<128x128xf32>
    %72 = arith.addf %69, %71 : vector<128x128xf32>
    %c0_47 = arith.constant 0 : index
    %c0_48 = arith.constant 0 : index
    %73 = vector.load %arg9[%c0_47, %c0_48] : memref<128x128xf32, #tpu.memory_space<vmem>>, vector<128x128xf32>
    tpu.vector_store %arg9[%c0_47, %c0_48], %72 {strides = array<i32>} : memref<128x128xf32, #tpu.memory_space<vmem>>, vector<128x128xf32>,
    return
  }
  func.func @transform_0(%arg0: i32, %arg1: i32) -> (i32, i32, i32, i32) {
    %c0_i32 = arith.constant 0 : i32
    %c0_i32_0 = arith.constant 0 : i32
    %c0_i32_1 = arith.constant 0 : i32
    return %arg0, %arg1, %c0_i32, %c0_i32_0 : i32, i32, i32, i32
  }
  func.func @transform_1(%arg0: i32, %arg1: i32) -> (i32, i32, i32, i32) {
    %c1_i32 = arith.constant 1 : i32
    %0 = arith.addi %arg1, %c1_i32 : i32
    %c8_i32 = arith.constant 8 : i32
    %1 = arith.muli %0, %c8_i32 : i32
    %c0_i32 = arith.constant 0 : i32
    %c0_i32_0 = arith.constant 0 : i32
    %c0_i32_1 = arith.constant 0 : i32
    return %arg0, %1, %c0_i32, %c0_i32_0 : i32, i32, i32, i32
  }
  func.func @transform_2(%arg0: i32, %arg1: i32) -> (i32, i32, i32, i32) {
    %c1_i32 = arith.constant 1 : i32
    %0 = arith.addi %arg1, %c1_i32 : i32
    %c8_i32 = arith.constant 8 : i32
    %1 = arith.muli %0, %c8_i32 : i32
    %c1_i32_0 = arith.constant 1 : i32
    %2 = arith.addi %1, %c1_i32_0 : i32
    %c0_i32 = arith.constant 0 : i32
    %c0_i32_1 = arith.constant 0 : i32
    %c0_i32_2 = arith.constant 0 : i32
    return %arg0, %2, %c0_i32, %c0_i32_1 : i32, i32, i32, i32
  }
  func.func @transform_3(%arg0: i32, %arg1: i32) -> (i32, i32, i32) {
    %c0_i32 = arith.constant 0 : i32
    %c0_i32_0 = arith.constant 0 : i32
    %c0_i32_1 = arith.constant 0 : i32
    %c0_i32_2 = arith.constant 0 : i32
    return %c0_i32, %c0_i32_0, %c0_i32_1 : i32, i32, i32
  }
  func.func @transform_4(%arg0: i32, %arg1: i32) -> (i32, i32) {
    %c0_i32 = arith.constant 0 : i32
    %c0_i32_0 = arith.constant 0 : i32
    %c0_i32_1 = arith.constant 0 : i32
    return %c0_i32, %c0_i32_0 : i32, i32
  }
  func.func @transform_5(%arg0: i32, %arg1: i32) -> (i32, i32) {
    %c0_i32 = arith.constant 0 : i32
    %c0_i32_0 = arith.constant 0 : i32
    %c0_i32_1 = arith.constant 0 : i32
    return %c0_i32, %c0_i32_0 : i32, i32
  }
  func.func @transform_6(%arg0: i32, %arg1: i32) -> (i32, i32) {
    %c0_i32 = arith.constant 0 : i32
    %c0_i32_0 = arith.constant 0 : i32
    %c0_i32_1 = arith.constant 0 : i32
    return %c0_i32, %c0_i32_0 : i32, i32
  }
  func.func @transform_7(%arg0: i32, %arg1: i32) -> (i32, i32) {
    %c2_i32 = arith.constant 2 : i32
    %0 = arith.muli %arg0, %c2_i32 : i32
    %1 = arith.addi %0, %arg1 : i32
    %c0_i32 = arith.constant 0 : i32
    %c0_i32_0 = arith.constant 0 : i32
    return %1, %c0_i32 : i32, i32
  }
}

</mosaic_0001>

<llo_original>
// kernel: object_detection_forward.1
$region0: #{object_detection_forward.1}
  #allocation0 [shape = 'u32[]', space=smem, size = 0x4, offset = 0x4, fixed_abs, tag = 'smem constant byte address 0x4 - core index']
  #allocation1 [shape = 'u32[144,128]{1,0:T(1,128)}', space=vmem, size = 0x12000, scoped, tag = 'internal scratch']
  %s0 = inlined_call_operand.vmem [shape: bf16[2,18,18,4], index: 0, kind: input, shape index: {}, may-alias: {0,1,2}]
  %s1 = inlined_call_operand.vmem [shape: bf16[2,18,18,4], index: 1, kind: input, shape index: {}, may-alias: {0,1,2}]
  %s2 = inlined_call_operand.vmem [shape: bf16[2,18,18,4], index: 2, kind: input, shape index: {}, may-alias: {0,1,2}]
  %s3 = inlined_call_operand.vmem [shape: bf16[9,4,128], index: 3, kind: input, shape index: {}]
  %s4 = inlined_call_operand.vmem [shape: f32[1,128], index: 4, kind: input, shape index: {}]
  %s5 = inlined_call_operand.vmem [shape: bf16[128,128], index: 5, kind: input, shape index: {}]
  %s6 = inlined_call_operand.vmem [shape: f32[1,128], index: 6, kind: input, shape index: {}]
  %s7 = inlined_call_operand.vmem [shape: f32[512,128], index: 7, kind: output, shape index: {}]
  %s8 = sld [smem:[#allocation0]]
  $region61: #{object_detection_forward.1} parent=0
    _
  %s10 = ssub.s32 1, %s8
  %s11 = scalar_select 0, %s10, %s8
  loop: start=0, step=1, limit=6
  $region2: #{object_detection_forward.1} parent=0 // loop_pre_header
    _
  $region3: #{object_detection_forward.1} parent=0 // loop_header
    %s13 = sphi 0, %s17
    %p14 = scmp.ge.s32.totalorder %s13, 6
    %s20 = sphi 0, %s32
    %s21 = sphi 0, %s28
    %s22 = sphi 0, %s20
    %s23 = sphi 0, %s21
    %s24 = sphi 0, %s22
    %s25 = sphi 0, %s23
    %s37 = sphi 0, %s39
    %s40 = sphi 0, %s37
    %s41 = sphi 0, %s40
    %s57 = sphi 0, %s41
    %s69 = sphi 0, %s71
    %s72 = sphi 0, %s69
    %s73 = sphi 0, %s72
    %s89 = sphi 0, %s73
    %s103 = sphi 0, %s105
    %s106 = sphi 0, %s103
    %s107 = sphi 0, %s106
    %s123 = sphi 0, %s107
    %s127 = sphi 0, %s127
    %s129 = sphi 0, %s127
    %s130 = sphi 0, %s129
    %s144 = sphi 0, %s130
    %s148 = sphi 0, %s148
    %s150 = sphi 0, %s148
    %s151 = sphi 0, %s150
    %s165 = sphi 0, %s151
    %s169 = sphi 0, %s169
    %s171 = sphi 0, %s169
    %s172 = sphi 0, %s171
    %s186 = sphi 0, %s172
    %s190 = sphi 0, %s190
    %s192 = sphi 0, %s190
    %s193 = sphi 0, %s192
    %s207 = sphi 0, %s193
    %s217 = sphi 0, %s219
    %s220 = sphi 0, %s217
    %s221 = sphi 0, %s220
    %s237 = sphi 0, %s221
  $region4: #{object_detection_forward.1} parent=0 // loop_header_branch
    %16 = sbr.rel (%p14) target = $region8
  $region5: #{object_detection_forward.1} parent=0 // loop_body
    %s18 = ssub.s32 %s13, 1
    %s19 = ssub.s32 %s13, 2
    %s26 = sadd.s32 1, %s21
    %p27 = scmp.ge.s32.totalorder %s26, 2
    %s28 = scalar_select %p27, 0, %s26
    %s29 = sadd.s32 1, %s20
    %s30 = scalar_select %p27, %s29, %s20
    %p31 = scmp.ge.s32.totalorder %s30, 2
    %s32 = scalar_select %p31, 0, %s30
    %s33 = ssub.s32 %s20, %s32
    %s34 = ssub.s32 %s21, %s28
    %s35 = sor.u32 %s33, %s34
    %p36 = scmp.eq.s32.totalorder %s35, 0
    %s38 = sadd.s32 %s37, 1
    %s39 = scalar_select %p36, %s37, %s38
    %p42 = pneg %p36
    %p43 = scmp.eq.s32.totalorder %s13, 3
    %p44 = por %p42, %p43
    %p45 = scmp.ne.s32.totalorder %s37, %s40
    %p46 = scmp.eq.s32.totalorder %s13, 0
    %p47 = por %p45, %p46
    %p48 = scmp.ne.s32.totalorder %s37, %s40
    %p49 = scmp.eq.s32.totalorder %s18, 3
    %p50 = por %p48, %p49
    %p51 = scmp.ne.s32.totalorder %s40, %s41
    %p52 = scmp.eq.s32.totalorder %s18, 0
    %p53 = por %p51, %p52
    %p54 = scmp.ne.s32.totalorder %s40, %s41
    %p55 = scmp.eq.s32.totalorder %s19, 3
    %p56 = por %p54, %p55
    %p58 = scmp.ne.s32.totalorder %s41, %s57
    %p59 = scmp.eq.s32.totalorder %s19, 0
    %p60 = por %p58, %p59
    %s61 = sadd.s32 %s21, 1
    %s62 = smul.u32 %s61, 8
    %s63 = sadd.s32 %s28, 1
    %s64 = smul.u32 %s63, 8
    %s65 = ssub.s32 %s20, %s32
    %s66 = ssub.s32 %s62, %s64
    %s67 = sor.u32 %s65, %s66
    %p68 = scmp.eq.s32.totalorder %s67, 0
    %s70 = sadd.s32 %s69, 1
    %s71 = scalar_select %p68, %s69, %s70
    %p74 = pneg %p68
    %p75 = scmp.eq.s32.totalorder %s13, 3
    %p76 = por %p74, %p75
    %p77 = scmp.ne.s32.totalorder %s69, %s72
    %p78 = scmp.eq.s32.totalorder %s13, 0
    %p79 = por %p77, %p78
    %p80 = scmp.ne.s32.totalorder %s69, %s72
    %p81 = scmp.eq.s32.totalorder %s18, 3
    %p82 = por %p80, %p81
    %p83 = scmp.ne.s32.totalorder %s72, %s73
    %p84 = scmp.eq.s32.totalorder %s18, 0
    %p85 = por %p83, %p84
    %p86 = scmp.ne.s32.totalorder %s72, %s73
    %p87 = scmp.eq.s32.totalorder %s19, 3
    %p88 = por %p86, %p87
    %p90 = scmp.ne.s32.totalorder %s73, %s89
    %p91 = scmp.eq.s32.totalorder %s19, 0
    %p92 = por %p90, %p91
    %s93 = sadd.s32 %s21, 1
    %s94 = smul.u32 %s93, 8
    %s95 = sadd.s32 %s94, 1
    %s96 = sadd.s32 %s28, 1
    %s97 = smul.u32 %s96, 8
    %s98 = sadd.s32 %s97, 1
    %s99 = ssub.s32 %s20, %s32
    %s100 = ssub.s32 %s95, %s98
    %s101 = sor.u32 %s99, %s100
    %p102 = scmp.eq.s32.totalorder %s101, 0
    %s104 = sadd.s32 %s103, 1
    %s105 = scalar_select %p102, %s103, %s104
    %p108 = pneg %p102
    %p109 = scmp.eq.s32.totalorder %s13, 3
    %p110 = por %p108, %p109
    %p111 = scmp.ne.s32.totalorder %s103, %s106
    %p112 = scmp.eq.s32.totalorder %s13, 0
    %p113 = por %p111, %p112
    %p114 = scmp.ne.s32.totalorder %s103, %s106
    %p115 = scmp.eq.s32.totalorder %s18, 3
    %p116 = por %p114, %p115
    %p117 = scmp.ne.s32.totalorder %s106, %s107
    %p118 = scmp.eq.s32.totalorder %s18, 0
    %p119 = por %p117, %p118
    %p120 = scmp.ne.s32.totalorder %s106, %s107
    %p121 = scmp.eq.s32.totalorder %s19, 3
    %p122 = por %p120, %p121
    %p124 = scmp.ne.s32.totalorder %s107, %s123
    %p125 = scmp.eq.s32.totalorder %s19, 0
    %p126 = por %p124, %p125
    %s128 = sadd.s32 %s127, 1
    %p131 = scmp.eq.s32.totalorder %s13, 3
    %p132 = scmp.ne.s32.totalorder %s127, %s129
    %p133 = scmp.eq.s32.totalorder %s13, 0
    %p134 = por %p132, %p133
    %p135 = scmp.ne.s32.totalorder %s127, %s129
    %p136 = scmp.eq.s32.totalorder %s18, 3
    %p137 = por %p135, %p136
    %p138 = scmp.ne.s32.totalorder %s129, %s130
    %p139 = scmp.eq.s32.totalorder %s18, 0
    %p140 = por %p138, %p139
    %p141 = scmp.ne.s32.totalorder %s129, %s130
    %p142 = scmp.eq.s32.totalorder %s19, 3
    %p143 = por %p141, %p142
    %p145 = scmp.ne.s32.totalorder %s130, %s144
    %p146 = scmp.eq.s32.totalorder %s19, 0
    %p147 = por %p145, %p146
    %s149 = sadd.s32 %s148, 1
    %p152 = scmp.eq.s32.totalorder %s13, 3
    %p153 = scmp.ne.s32.totalorder %s148, %s150
    %p154 = scmp.eq.s32.totalorder %s13, 0
    %p155 = por %p153, %p154
    %p156 = scmp.ne.s32.totalorder %s148, %s150
    %p157 = scmp.eq.s32.totalorder %s18, 3
    %p158 = por %p156, %p157
    %p159 = scmp.ne.s32.totalorder %s150, %s151
    %p160 = scmp.eq.s32.totalorder %s18, 0
    %p161 = por %p159, %p160
    %p162 = scmp.ne.s32.totalorder %s150, %s151
    %p163 = scmp.eq.s32.totalorder %s19, 3
    %p164 = por %p162, %p163
    %p166 = scmp.ne.s32.totalorder %s151, %s165
    %p167 = scmp.eq.s32.totalorder %s19, 0
    %p168 = por %p166, %p167
    %s170 = sadd.s32 %s169, 1
    %p173 = scmp.eq.s32.totalorder %s13, 3
    %p174 = scmp.ne.s32.totalorder %s169, %s171
    %p175 = scmp.eq.s32.totalorder %s13, 0
    %p176 = por %p174, %p175
    %p177 = scmp.ne.s32.totalorder %s169, %s171
    %p178 = scmp.eq.s32.totalorder %s18, 3
    %p179 = por %p177, %p178
    %p180 = scmp.ne.s32.totalorder %s171, %s172
    %p181 = scmp.eq.s32.totalorder %s18, 0
    %p182 = por %p180, %p181
    %p183 = scmp.ne.s32.totalorder %s171, %s172
    %p184 = scmp.eq.s32.totalorder %s19, 3
    %p185 = por %p183, %p184
    %p187 = scmp.ne.s32.totalorder %s172, %s186
    %p188 = scmp.eq.s32.totalorder %s19, 0
    %p189 = por %p187, %p188
    %s191 = sadd.s32 %s190, 1
    %p194 = scmp.eq.s32.totalorder %s13, 3
    %p195 = scmp.ne.s32.totalorder %s190, %s192
    %p196 = scmp.eq.s32.totalorder %s13, 0
    %p197 = por %p195, %p196
    %p198 = scmp.ne.s32.totalorder %s190, %s192
    %p199 = scmp.eq.s32.totalorder %s18, 3
    %p200 = por %p198, %p199
    %p201 = scmp.ne.s32.totalorder %s192, %s193
    %p202 = scmp.eq.s32.totalorder %s18, 0
    %p203 = por %p201, %p202
    %p204 = scmp.ne.s32.totalorder %s192, %s193
    %p205 = scmp.eq.s32.totalorder %s19, 3
    %p206 = por %p204, %p205
    %p208 = scmp.ne.s32.totalorder %s193, %s207
    %p209 = scmp.eq.s32.totalorder %s19, 0
    %p210 = por %p208, %p209
    %s211 = smul.u32 %s20, 2
    %s212 = sadd.s32 %s211, %s21
    %s213 = smul.u32 %s32, 2
    %s214 = sadd.s32 %s213, %s28
    %s215 = ssub.s32 %s212, %s214
    %p216 = scmp.eq.s32.totalorder %s215, 0
    %s218 = sadd.s32 %s217, 1
    %s219 = scalar_select %p216, %s217, %s218
    %p222 = pneg %p216
    %p223 = scmp.eq.s32.totalorder %s13, 3
    %p224 = por %p222, %p223
    %p225 = scmp.ne.s32.totalorder %s217, %s220
    %p226 = scmp.eq.s32.totalorder %s13, 0
    %p227 = por %p225, %p226
    %p228 = scmp.ne.s32.totalorder %s217, %s220
    %p229 = scmp.eq.s32.totalorder %s18, 3
    %p230 = por %p228, %p229
    %p231 = scmp.ne.s32.totalorder %s220, %s221
    %p232 = scmp.eq.s32.totalorder %s18, 0
    %p233 = por %p231, %p232
    %p234 = scmp.ne.s32.totalorder %s220, %s221
    %p235 = scmp.eq.s32.totalorder %s19, 3
    %p236 = por %p234, %p235
    %p238 = scmp.ne.s32.totalorder %s221, %s237
    %p239 = scmp.eq.s32.totalorder %s19, 0
    %p240 = por %p238, %p239
    %p241 = scmp.le.s32.totalorder 1, %s13
    %p242 = scmp.lt.s32.totalorder %s13, 5
    %p243 = pnand %p241, %p242
    %p244 = pneg %p243
    // Predicated region
    $region9: #{object_detection_forward.1} parent=5 // pred_check
      _
    $region10: #{object_detection_forward.1} parent=5 // pred_check_branch
      %246 = sbr.rel (%p243) target = $region12
    $region11: #{object_detection_forward.1} parent=5 // pred_region
      %s247 = ssub.s32 %s13, 1
      // Predicated region
      $region13: #{object_detection_forward.1} parent=11 // pred_check
        %p248 = pneg %p140
      $region14: #{object_detection_forward.1} parent=11 // pred_check_branch
        %250 = sbr.rel (%p248) target = $region16
      $region15: #{object_detection_forward.1} parent=11 // pred_region
        _
      $region16: #{object_detection_forward.1} parent=11 // pred_fallthru
        _
      // Predicated region
      $region17: #{object_detection_forward.1} parent=11 // pred_check
        %p251 = pneg %p161
      $region18: #{object_detection_forward.1} parent=11 // pred_check_branch
        %253 = sbr.rel (%p251) target = $region20
      $region19: #{object_detection_forward.1} parent=11 // pred_region
        _
      $region20: #{object_detection_forward.1} parent=11 // pred_fallthru
        _
      // Predicated region
      $region21: #{object_detection_forward.1} parent=11 // pred_check
        %p254 = pneg %p182
      $region22: #{object_detection_forward.1} parent=11 // pred_check_branch
        %256 = sbr.rel (%p254) target = $region24
      $region23: #{object_detection_forward.1} parent=11 // pred_region
        _
      $region24: #{object_detection_forward.1} parent=11 // pred_fallthru
        _
      // Predicated region
      $region25: #{object_detection_forward.1} parent=11 // pred_check
        %p257 = pneg %p203
      $region26: #{object_detection_forward.1} parent=11 // pred_check_branch
        %259 = sbr.rel (%p257) target = $region28
      $region27: #{object_detection_forward.1} parent=11 // pred_region
        _
      $region28: #{object_detection_forward.1} parent=11 // pred_fallthru
        _
    $region12: #{object_detection_forward.1} parent=5 // pred_fallthru
      _
    %p260 = scmp.lt.s32.totalorder %s13, 4
    // Predicated region
    $region29: #{object_detection_forward.1} parent=5 // pred_check
      %p261 = pneg %p260
    $region30: #{object_detection_forward.1} parent=5 // pred_check_branch
      %263 = sbr.rel (%p261) target = $region32
    $region31: #{object_detection_forward.1} parent=5 // pred_region
      // Predicated region
      $region33: #{object_detection_forward.1} parent=31 // pred_check
        %p264 = pneg %p47
      $region34: #{object_detection_forward.1} parent=31 // pred_check_branch
        %266 = sbr.rel (%p264) target = $region36
      $region35: #{object_detection_forward.1} parent=31 // pred_region
        %s267 = smul.u32 8, %s21
        %s268 = ssub.s32 18, %s267
        %p269 = scmp.lt.s32.totalorder %s268, 8
        %s270 = scalar_select %p269, %s268, 8
        %s271 = smul.u32 64, %s270
        %s272 = smul.u32 %s271, 3
        %p273 = scmp.lt.s32.totalorder %s20, 1
        %s274 = scalar_select %p273, %s20, 1
        %p275 = scmp.lt.s32.totalorder %s267, 17
        %s276 = scalar_select %p275, %s267, 17
        %s277 = smul.addr %s276, 3
        %s278 = smul.addr %s274, 54
        %s279 = sadd.s32 %s277, %s278
        %s280 = smul.addr %s279, 4
        %s281 = scalar_lea.vmem %s0, %s280
        %s282 = smul.u32 8, %s21
        %s283 = ssub.s32 18, %s282
        %p284 = scmp.lt.s32.totalorder %s283, 8
        %s285 = scalar_select %p284, %s283, 8
        %s286 = smul.u32 64, %s285
        %s287 = smul.u32 %s286, 3
      $region36: #{object_detection_forward.1} parent=31 // pred_fallthru
        _
      // Predicated region
      $region37: #{object_detection_forward.1} parent=31 // pred_check
        %p288 = pneg %p79
      $region38: #{object_detection_forward.1} parent=31 // pred_check_branch
        %290 = sbr.rel (%p288) target = $region40
      $region39: #{object_detection_forward.1} parent=31 // pred_region
        %s291 = sadd.s32 %s21, 1
        %s292 = smul.u32 %s291, 8
        %p293 = scmp.lt.s32.totalorder %s20, 1
        %s294 = scalar_select %p293, %s20, 1
        %p295 = scmp.lt.s32.totalorder %s292, 17
        %s296 = scalar_select %p295, %s292, 17
        %s297 = smul.addr %s296, 3
        %s298 = smul.addr %s294, 54
        %s299 = sadd.s32 %s297, %s298
        %s300 = smul.addr %s299, 4
        %s301 = scalar_lea.vmem %s1, %s300
        %s302 = sadd.s32 %s21, 1
        %s303 = smul.u32 %s302, 8
      $region40: #{object_detection_forward.1} parent=31 // pred_fallthru
        _
      // Predicated region
      $region41: #{object_detection_forward.1} parent=31 // pred_check
        %p304 = pneg %p113
      $region42: #{object_detection_forward.1} parent=31 // pred_check_branch
        %306 = sbr.rel (%p304) target = $region44
      $region43: #{object_detection_forward.1} parent=31 // pred_region
        %s307 = sadd.s32 %s21, 1
        %s308 = smul.u32 %s307, 8
        %s309 = sadd.s32 %s308, 1
        %p310 = scmp.lt.s32.totalorder %s20, 1
        %s311 = scalar_select %p310, %s20, 1
        %p312 = scmp.lt.s32.totalorder %s309, 17
        %s313 = scalar_select %p312, %s309, 17
        %s314 = smul.addr %s313, 3
        %s315 = smul.addr %s311, 54
        %s316 = sadd.s32 %s314, %s315
        %s317 = smul.addr %s316, 4
        %s318 = scalar_lea.vmem %s2, %s317
        %s319 = sadd.s32 %s21, 1
        %s320 = smul.u32 %s319, 8
        %s321 = sadd.s32 %s320, 1
      $region44: #{object_detection_forward.1} parent=31 // pred_fallthru
        _
    $region32: #{object_detection_forward.1} parent=5 // pred_fallthru
      _
    %p322 = scmp.le.s32.totalorder 1, %s13
    %p323 = scmp.lt.s32.totalorder %s13, 5
    %p324 = pnand %p322, %p323
    %p325 = pneg %p324
    // Predicated region
    $region45: #{object_detection_forward.1} parent=5 // pred_check
      _
    $region46: #{object_detection_forward.1} parent=5 // pred_check_branch
      %327 = sbr.rel (%p324) target = $region48
    $region47: #{object_detection_forward.1} parent=5 // pred_region
      %s328 = ssub.s32 %s13, 1
      %s329 = smul.u32 8, %s23
      %s330 = ssub.s32 18, %s329
      %p331 = scmp.lt.s32.totalorder %s330, 8
      %s332 = scalar_select %p331, %s330, 8
      %s333 = smul.u32 64, %s332
      %s334 = smul.u32 %s333, 3
      %p335 = scmp.lt.s32.totalorder %s22, 1
      %s336 = scalar_select %p335, %s22, 1
      %p337 = scmp.lt.s32.totalorder %s329, 17
      %s338 = scalar_select %p337, %s329, 17
      %s339 = smul.addr %s338, 3
      %s340 = smul.addr %s336, 54
      %s341 = sadd.s32 %s339, %s340
      %s342 = smul.addr %s341, 4
      %s343 = scalar_lea.vmem %s0, %s342
      %p344 = pneg %p53
      %p345 = pneg %p50
      %s346 = sadd.s32 %s23, 1
      %s347 = smul.u32 %s346, 8
      %p348 = scmp.lt.s32.totalorder %s22, 1
      %s349 = scalar_select %p348, %s22, 1
      %p350 = scmp.lt.s32.totalorder %s347, 17
      %s351 = scalar_select %p350, %s347, 17
      %s352 = smul.addr %s351, 3
      %s353 = smul.addr %s349, 54
      %s354 = sadd.s32 %s352, %s353
      %s355 = smul.addr %s354, 4
      %s356 = scalar_lea.vmem %s1, %s355
      %p357 = pneg %p85
      %p358 = pneg %p82
      %s359 = sadd.s32 %s23, 1
      %s360 = smul.u32 %s359, 8
      %s361 = sadd.s32 %s360, 1
      %p362 = scmp.lt.s32.totalorder %s22, 1
      %s363 = scalar_select %p362, %s22, 1
      %p364 = scmp.lt.s32.totalorder %s361, 17
      %s365 = scalar_select %p364, %s361, 17
      %s366 = smul.addr %s365, 3
      %s367 = smul.addr %s363, 54
      %s368 = sadd.s32 %s366, %s367
      %s369 = smul.addr %s368, 4
      %s370 = scalar_lea.vmem %s2, %s369
      %p371 = pneg %p119
      %p372 = pneg %p116
      %p373 = pneg %p140
      %p374 = pneg %p137
      %p375 = pneg %p161
      %p376 = pneg %p158
      %p377 = pneg %p182
      %p378 = pneg %p179
      %p379 = pneg %p203
      %p380 = pneg %p200
      %p381 = pneg %p233
      %p382 = pneg %p230
      %s383 = smul.u32 %s22, 2
      %s384 = sadd.s32 %s383, %s23
      %s385 = smul.u32 16, %s384
      %p386 = scmp.lt.s32.totalorder %s385, 63
      %s387 = scalar_select %p386, %s385, 63
      %s388 = smul.addr %s387, 8
      %s389 = scalar_lea.vmem %s7, %s388
      %s390 = smul.u32 8, %s23
      %s391 = ssub.s32 18, %s390
      %p392 = scmp.lt.s32.totalorder %s391, 8
      %s393 = scalar_select %p392, %s391, 8
      %s394 = smul.u32 64, %s393
      %s395 = smul.u32 %s394, 3
      %p396 = scmp.lt.s32.totalorder %s22, 1
      %s397 = scalar_select %p396, %s22, 1
      %p398 = scmp.lt.s32.totalorder %s390, 17
      %s399 = scalar_select %p398, %s390, 17
      %s400 = smul.addr %s399, 3
      %s401 = smul.addr %s397, 54
      %s402 = sadd.s32 %s400, %s401
      %s403 = smul.addr %s402, 4
      %s404 = scalar_lea.vmem %s0, %s403
      %s405 = smul.u32 8, %s23
      %s406 = ssub.s32 18, %s405
      %p407 = scmp.lt.s32.totalorder %s406, 8
      %s408 = scalar_select %p407, %s406, 8
      %s409 = smul.u32 64, %s408
      %s410 = smul.u32 %s409, 3
      %s411 = sadd.s32 %s23, 1
      %s412 = smul.u32 %s411, 8
      %p413 = scmp.lt.s32.totalorder %s22, 1
      %s414 = scalar_select %p413, %s22, 1
      %p415 = scmp.lt.s32.totalorder %s412, 17
      %s416 = scalar_select %p415, %s412, 17
      %s417 = smul.addr %s416, 3
      %s418 = smul.addr %s414, 54
      %s419 = sadd.s32 %s417, %s418
      %s420 = smul.addr %s419, 4
      %s421 = scalar_lea.vmem %s1, %s420
      %s422 = sadd.s32 %s23, 1
      %s423 = smul.u32 %s422, 8
      %s424 = sadd.s32 %s23, 1
      %s425 = smul.u32 %s424, 8
      %s426 = sadd.s32 %s425, 1
      %p427 = scmp.lt.s32.totalorder %s22, 1
      %s428 = scalar_select %p427, %s22, 1
      %p429 = scmp.lt.s32.totalorder %s426, 17
      %s430 = scalar_select %p429, %s426, 17
      %s431 = smul.addr %s430, 3
      %s432 = smul.addr %s428, 54
      %s433 = sadd.s32 %s431, %s432
      %s434 = smul.addr %s433, 4
      %s435 = scalar_lea.vmem %s2, %s434
      %s436 = sadd.s32 %s23, 1
      %s437 = smul.u32 %s436, 8
      %s438 = sadd.s32 %s437, 1
      %s439 = smul.u32 %s22, 2
      %s440 = sadd.s32 %s439, %s23
      %s441 = smul.u32 16, %s440
      %p442 = scmp.lt.s32.totalorder %s441, 63
      %s443 = scalar_select %p442, %s441, 63
      %s444 = smul.addr %s443, 8
      %s445 = scalar_lea.vmem %s7, %s444
      %s446 = smul.u32 %s22, 2
      %s447 = sadd.s32 %s446, %s23
      %s448 = smul.u32 16, %s447
      %v450 = vld [vmem:[%s404] sm:$0xf]
      %v451 = vld [vmem:[%s404 + $0x4] sm:$0xf]
      %v452 = vld [vmem:[%s404 + $0x8] sm:$0x1]
      %v453 = vld [vmem:[%s404 + $0xc] sm:$0xf]
      %v454 = vld [vmem:[%s404 + $0x10] sm:$0xf]
      %v455 = vld [vmem:[%s404 + $0x14] sm:$0x1]
      %v456 = vld [vmem:[%s404 + $0x18] sm:$0xf]
      %v457 = vld [vmem:[%s404 + $0x1c] sm:$0xf]
      %v458 = vld [vmem:[%s404 + $0x20] sm:$0x1]
      %v459 = vld [vmem:[%s404 + $0x24] sm:$0xf]
      %v460 = vld [vmem:[%s404 + $0x28] sm:$0xf]
      %v461 = vld [vmem:[%s404 + $0x2c] sm:$0x1]
      %v462 = vld [vmem:[%s404 + $0x30] sm:$0xf]
      %v463 = vld [vmem:[%s404 + $0x34] sm:$0xf]
      %v464 = vld [vmem:[%s404 + $0x38] sm:$0x1]
      %v465 = vld [vmem:[%s404 + $0x3c] sm:$0xf]
      %v466 = vld [vmem:[%s404 + $0x40] sm:$0xf]
      %v467 = vld [vmem:[%s404 + $0x44] sm:$0x1]
      %v468 = vld [vmem:[%s404 + $0x48] sm:$0xf]
      %v469 = vld [vmem:[%s404 + $0x4c] sm:$0xf]
      %v470 = vld [vmem:[%s404 + $0x50] sm:$0x1]
      %v471 = vld [vmem:[%s404 + $0x54] sm:$0xf]
      %v472 = vld [vmem:[%s404 + $0x58] sm:$0xf]
      %v473 = vld [vmem:[%s404 + $0x5c] sm:$0x1]
      %v474 = vld [vmem:[%s421] sm:$0xf]
      %v475 = vld [vmem:[%s421 + $0x4] sm:$0xf]
      %v476 = vld [vmem:[%s421 + $0x8] sm:$0x1]
      %v477 = vld [vmem:[%s435] sm:$0xf]
      %v478 = vld [vmem:[%s435 + $0x4] sm:$0xf]
      %v479 = vld [vmem:[%s435 + $0x8] sm:$0x1]
      %v480 = vld [vmem:[%s3] sm:$0x3]
      %vm481 = vsmask.f32 3328
      %vm482 = vsmask.f32 7440
      %vm483 = vmor %vm481, %vm482
      %v485 = vshrl.u32 %v450, 16
      %v487 = vrot.slane %v485, 4
      %v488 = vshll.u32 %v450, 16
      %v490 = vrot.slane %v488, 5
      %v491 = vor.u32 %v487, %v490
      %v492 = vrot.slane %v491, 4
      %v494 = vshll.u32 %v451, 16
      %v496 = vrot.slane %v494, 5
      %v497 = vsel %vm483, %v492, %v496
      %v498 = vshrl.u32 %v451, 16
      %v500 = vrot.slane %v498, 4
      %v501 = vor.u32 %v500, %v496
      %v502 = vrot.slane %v501, 4
      %v504 = vshll.u32 %v452, 16
      %v506 = vrot.slane %v504, 5
      %v507 = vsel %vm483, %v502, %v506
      %v509 = vshrl.u32 %v453, 16
      %v511 = vrot.slane %v509, 4
      %v512 = vshll.u32 %v453, 16
      %v514 = vrot.slane %v512, 5
      %v515 = vor.u32 %v511, %v514
      %v516 = vrot.slane %v515, 4
      %v518 = vshll.u32 %v454, 16
      %v520 = vrot.slane %v518, 5
      %v521 = vsel %vm483, %v516, %v520
      %v522 = vshrl.u32 %v454, 16
      %v524 = vrot.slane %v522, 4
      %v525 = vor.u32 %v524, %v520
      %v526 = vrot.slane %v525, 4
      %v528 = vshll.u32 %v455, 16
      %v530 = vrot.slane %v528, 5
      %v531 = vsel %vm483, %v526, %v530
      %v533 = vshrl.u32 %v456, 16
      %v535 = vrot.slane %v533, 4
      %v536 = vshll.u32 %v456, 16
      %v538 = vrot.slane %v536, 5
      %v539 = vor.u32 %v535, %v538
      %v540 = vrot.slane %v539, 4
      %v542 = vshll.u32 %v457, 16
      %v544 = vrot.slane %v542, 5
      %v545 = vsel %vm483, %v540, %v544
      %v546 = vshrl.u32 %v457, 16
      %v548 = vrot.slane %v546, 4
      %v549 = vor.u32 %v548, %v544
      %v550 = vrot.slane %v549, 4
      %v552 = vshll.u32 %v458, 16
      %v554 = vrot.slane %v552, 5
      %v555 = vsel %vm483, %v550, %v554
      %v557 = vshrl.u32 %v459, 16
      %v559 = vrot.slane %v557, 4
      %v560 = vshll.u32 %v459, 16
      %v562 = vrot.slane %v560, 5
      %v563 = vor.u32 %v559, %v562
      %v564 = vrot.slane %v563, 4
      %v566 = vshll.u32 %v460, 16
      %v568 = vrot.slane %v566, 5
      %v569 = vsel %vm483, %v564, %v568
      %v570 = vshrl.u32 %v460, 16
      %v572 = vrot.slane %v570, 4
      %v573 = vor.u32 %v572, %v568
      %v574 = vrot.slane %v573, 4
      %v576 = vshll.u32 %v461, 16
      %v578 = vrot.slane %v576, 5
      %v579 = vsel %vm483, %v574, %v578
      %v581 = vshrl.u32 %v462, 16
      %v583 = vrot.slane %v581, 4
      %v584 = vshll.u32 %v462, 16
      %v586 = vrot.slane %v584, 5
      %v587 = vor.u32 %v583, %v586
      %v588 = vrot.slane %v587, 4
      %v590 = vshll.u32 %v463, 16
      %v592 = vrot.slane %v590, 5
      %v593 = vsel %vm483, %v588, %v592
      %v594 = vshrl.u32 %v463, 16
      %v596 = vrot.slane %v594, 4
      %v597 = vor.u32 %v596, %v592
      %v598 = vrot.slane %v597, 4
      %v600 = vshll.u32 %v464, 16
      %v602 = vrot.slane %v600, 5
      %v603 = vsel %vm483, %v598, %v602
      %v605 = vshrl.u32 %v465, 16
      %v607 = vrot.slane %v605, 4
      %v608 = vshll.u32 %v465, 16
      %v610 = vrot.slane %v608, 5
      %v611 = vor.u32 %v607, %v610
      %v612 = vrot.slane %v611, 4
      %v614 = vshll.u32 %v466, 16
      %v616 = vrot.slane %v614, 5
      %v617 = vsel %vm483, %v612, %v616
      %v618 = vshrl.u32 %v466, 16
      %v620 = vrot.slane %v618, 4
      %v621 = vor.u32 %v620, %v616
      %v622 = vrot.slane %v621, 4
      %v624 = vshll.u32 %v467, 16
      %v626 = vrot.slane %v624, 5
      %v627 = vsel %vm483, %v622, %v626
      %v629 = vshrl.u32 %v468, 16
      %v631 = vrot.slane %v629, 4
      %v632 = vshll.u32 %v468, 16
      %v634 = vrot.slane %v632, 5
      %v635 = vor.u32 %v631, %v634
      %v636 = vrot.slane %v635, 4
      %v638 = vshll.u32 %v469, 16
      %v640 = vrot.slane %v638, 5
      %v641 = vsel %vm483, %v636, %v640
      %v642 = vshrl.u32 %v469, 16
      %v644 = vrot.slane %v642, 4
      %v645 = vor.u32 %v644, %v640
      %v646 = vrot.slane %v645, 4
      %v648 = vshll.u32 %v470, 16
      %v650 = vrot.slane %v648, 5
      %v651 = vsel %vm483, %v646, %v650
      %v653 = vshrl.u32 %v471, 16
      %v655 = vrot.slane %v653, 4
      %v656 = vshll.u32 %v471, 16
      %v658 = vrot.slane %v656, 5
      %v659 = vor.u32 %v655, %v658
      %v660 = vrot.slane %v659, 4
      %v662 = vshll.u32 %v472, 16
      %v664 = vrot.slane %v662, 5
      %v665 = vsel %vm483, %v660, %v664
      %v666 = vshrl.u32 %v472, 16
      %v668 = vrot.slane %v666, 4
      %v669 = vor.u32 %v668, %v664
      %v670 = vrot.slane %v669, 4
      %v672 = vshll.u32 %v473, 16
      %v674 = vrot.slane %v672, 5
      %v675 = vsel %vm483, %v670, %v674
      %s676 = scalar_lea.vmem %s3, 2
      %v677 = vld [vmem:[%s676] sm:$0x3]
      %v678 = vunpack.c.l.b16 %v497
      %v679 = vunpack.c.l.b16 %v507
      %v680 = vunpack.c.l.b16 %v521
      %v681 = vunpack.c.l.b16 %v531
      %v682 = vunpack.c.l.b16 %v545
      %v683 = vunpack.c.l.b16 %v555
      %v684 = vunpack.c.l.b16 %v569
      %v685 = vunpack.c.l.b16 %v579
      %v686 = vunpack.c.l.b16 %v593
      %v687 = vunpack.c.l.b16 %v603
      %v688 = vunpack.c.l.b16 %v617
      %v689 = vunpack.c.l.b16 %v627
      %v690 = vunpack.c.l.b16 %v641
      %v691 = vunpack.c.l.b16 %v651
      %v692 = vunpack.c.l.b16 %v665
      %v693 = vunpack.c.l.b16 %v675
      %v694 = vpack.c.b16 %v679, %v678
      %v695 = vpack.c.b16 %v681, %v680
      %v696 = vpack.c.b16 %v683, %v682
      %v697 = vpack.c.b16 %v685, %v684
      %v698 = vpack.c.b16 %v687, %v686
      %v699 = vpack.c.b16 %v689, %v688
      %v700 = vpack.c.b16 %v691, %v690
      %v701 = vpack.c.b16 %v693, %v692
      %vm702 = vcmask 31744
      %v704 = vsel %vm702, %v694, 0
      %v707 = vsel %vm702, %v695, 0
      %v710 = vsel %vm702, %v696, 0
      %v713 = vsel %vm702, %v697, 0
      %v716 = vsel %vm702, %v698, 0
      %v719 = vsel %vm702, %v699, 0
      %v722 = vsel %vm702, %v700, 0
      %v725 = vsel %vm702, %v701, 0
      %vm727 = vcmask 1041408
      %v729 = vsel %vm727, %v677, 0
      %731 = vmatprep.subr.bf16.mxu0 0
      %732 = vmatpush1.bf16.msra.mxu0 0
      %733 = vmatprep.subr.bf16.mxu0 0
      %734 = vmatpush1.bf16.msra.mxu0 0
      %735 = vmatprep.subr.bf16.mxu0 0
      %736 = vmatpush1.bf16.msra.mxu0 0
      %737 = vmatprep.subr.bf16.mxu0 0
      %738 = vmatpush1.bf16.msra.mxu0 0
      %739 = vmatprep.subr.bf16.mxu0 0
      %740 = vmatpush1.bf16.msra.mxu0 0
      %741 = vmatprep.subr.bf16.mxu0 0
      %742 = vmatpush1.bf16.msra.mxu0 0
      %743 = vmatprep.subr.bf16.mxu0 0
      %744 = vmatpush1.bf16.msra.mxu0 0
      %745 = vmatprep.subr.bf16.mxu0 0
      %746 = vmatpush1.bf16.msra.mxu0 %v729
      %747 = vmatprep.subr.bf16.mxu0 0
      %748 = vmatpush2.bf16.msra.mxu0 0
      %749 = vmatprep.subr.bf16.mxu0 0
      %750 = vmatpush2.bf16.msra.mxu0 0
      %751 = vmatprep.subr.bf16.mxu0 0
      %752 = vmatpush2.bf16.msra.mxu0 0
      %753 = vmatprep.subr.bf16.mxu0 0
      %754 = vmatpush2.bf16.msra.mxu0 0
      %755 = vmatprep.subr.bf16.mxu0 0
      %756 = vmatpush2.bf16.msra.mxu0 0
      %757 = vmatprep.subr.bf16.mxu0 0
      %758 = vmatpush2.bf16.msra.mxu0 0
      %759 = vmatprep.subr.bf16.mxu0 0
      %760 = vmatpush2.bf16.msra.mxu0 0
      %761 = vmatprep.subr.bf16.mxu0 0
      %762 = vmatpush2.bf16.msra.mxu0 0
      %763 = vmatprep.mubr.bf16.mxu0 0
      %764 = vmatmul.mubr.bf16.gmra.mxu0 %v704
      %v765 = vpop.f32.mrf.mxu0
      %v766 = vadd.f32 0.0, %v765
      %v767 = vpop.f32.mrf.mxu0
      %v768 = vpop.f32.mrf.mxu0
      %v769 = vadd.f32 0.0, %v768
      %v770 = vpop.f32.mrf.mxu0
      %771 = vmatprep.mubr.bf16.mxu0 0
      %772 = vmatmul.mubr.bf16.gmra.mxu0 %v707
      %v773 = vpop.f32.mrf.mxu0
      %v774 = vadd.f32 0.0, %v773
      %v775 = vpop.f32.mrf.mxu0
      %v776 = vpop.f32.mrf.mxu0
      %v777 = vadd.f32 0.0, %v776
      %v778 = vpop.f32.mrf.mxu0
      %779 = vmatprep.mubr.bf16.mxu0 0
      %780 = vmatmul.mubr.bf16.gmra.mxu0 %v710
      %v781 = vpop.f32.mrf.mxu0
      %v782 = vadd.f32 0.0, %v781
      %v783 = vpop.f32.mrf.mxu0
      %v784 = vpop.f32.mrf.mxu0
      %v785 = vadd.f32 0.0, %v784
      %v786 = vpop.f32.mrf.mxu0
      %787 = vmatprep.mubr.bf16.mxu0 0
      %788 = vmatmul.mubr.bf16.gmra.mxu0 %v713
      %v789 = vpop.f32.mrf.mxu0
      %v790 = vadd.f32 0.0, %v789
      %v791 = vpop.f32.mrf.mxu0
      %v792 = vpop.f32.mrf.mxu0
      %v793 = vadd.f32 0.0, %v792
      %v794 = vpop.f32.mrf.mxu0
      %795 = vmatprep.mubr.bf16.mxu0 0
      %796 = vmatmul.mubr.bf16.gmra.mxu0 %v716
      %v797 = vpop.f32.mrf.mxu0
      %v798 = vadd.f32 0.0, %v797
      %v799 = vpop.f32.mrf.mxu0
      %v800 = vpop.f32.mrf.mxu0
      %v801 = vadd.f32 0.0, %v800
      %v802 = vpop.f32.mrf.mxu0
      %803 = vmatprep.mubr.bf16.mxu0 0
      %804 = vmatmul.mubr.bf16.gmra.mxu0 %v719
      %v805 = vpop.f32.mrf.mxu0
      %v806 = vadd.f32 0.0, %v805
      %v807 = vpop.f32.mrf.mxu0
      %v808 = vpop.f32.mrf.mxu0
      %v809 = vadd.f32 0.0, %v808
      %v810 = vpop.f32.mrf.mxu0
      %811 = vmatprep.mubr.bf16.mxu0 0
      %812 = vmatmul.mubr.bf16.gmra.mxu0 %v722
      %v813 = vpop.f32.mrf.mxu0
      %v814 = vadd.f32 0.0, %v813
      %v815 = vpop.f32.mrf.mxu0
      %v816 = vpop.f32.mrf.mxu0
      %v817 = vadd.f32 0.0, %v816
      %v818 = vpop.f32.mrf.mxu0
      %819 = vmatprep.mubr.bf16.mxu0 0
      %820 = vmatmul.mubr.bf16.gmra.mxu0 %v725
      %v821 = vpop.f32.mrf.mxu0
      %v822 = vadd.f32 0.0, %v821
      %v823 = vpop.f32.mrf.mxu0
      %v824 = vpop.f32.mrf.mxu0
      %v825 = vadd.f32 0.0, %v824
      %v826 = vpop.f32.mrf.mxu0
      %827 = vdwg.mxu0
      %v844 = vunpack.c.l.b16 %v450
      %v845 = vunpack.c.l.b16 %v451
      %v846 = vunpack.c.l.b16 %v453
      %v847 = vunpack.c.l.b16 %v454
      %v848 = vunpack.c.l.b16 %v456
      %v849 = vunpack.c.l.b16 %v457
      %v850 = vunpack.c.l.b16 %v459
      %v851 = vunpack.c.l.b16 %v460
      %v852 = vunpack.c.l.b16 %v462
      %v853 = vunpack.c.l.b16 %v463
      %v854 = vunpack.c.l.b16 %v465
      %v855 = vunpack.c.l.b16 %v466
      %v856 = vunpack.c.l.b16 %v468
      %v857 = vunpack.c.l.b16 %v469
      %v858 = vunpack.c.l.b16 %v471
      %v859 = vunpack.c.l.b16 %v472
      %v860 = vpack.c.b16 %v845, %v844
      %v861 = vpack.c.b16 %v847, %v846
      %v862 = vpack.c.b16 %v849, %v848
      %v863 = vpack.c.b16 %v851, %v850
      %v864 = vpack.c.b16 %v853, %v852
      %v865 = vpack.c.b16 %v855, %v854
      %v866 = vpack.c.b16 %v857, %v856
      %v867 = vpack.c.b16 %v859, %v858
      %v869 = vsel %vm702, %v860, 0
      %v872 = vsel %vm702, %v861, 0
      %v875 = vsel %vm702, %v862, 0
      %v878 = vsel %vm702, %v863, 0
      %v881 = vsel %vm702, %v864, 0
      %v884 = vsel %vm702, %v865, 0
      %v887 = vsel %vm702, %v866, 0
      %v890 = vsel %vm702, %v867, 0
      %v893 = vsel %vm727, %v480, 0
      %895 = vmatprep.subr.bf16.mxu0 0
      %896 = vmatpush1.bf16.msra.mxu0 0
      %897 = vmatprep.subr.bf16.mxu0 0
      %898 = vmatpush1.bf16.msra.mxu0 0
      %899 = vmatprep.subr.bf16.mxu0 0
      %900 = vmatpush1.bf16.msra.mxu0 0
      %901 = vmatprep.subr.bf16.mxu0 0
      %902 = vmatpush1.bf16.msra.mxu0 0
      %903 = vmatprep.subr.bf16.mxu0 0
      %904 = vmatpush1.bf16.msra.mxu0 0
      %905 = vmatprep.subr.bf16.mxu0 0
      %906 = vmatpush1.bf16.msra.mxu0 0
      %907 = vmatprep.subr.bf16.mxu0 0
      %908 = vmatpush1.bf16.msra.mxu0 0
      %909 = vmatprep.subr.bf16.mxu0 0
      %910 = vmatpush1.bf16.msra.mxu0 %v893
      %911 = vmatprep.subr.bf16.mxu0 0
      %912 = vmatpush2.bf16.msra.mxu0 0
      %913 = vmatprep.subr.bf16.mxu0 0
      %914 = vmatpush2.bf16.msra.mxu0 0
      %915 = vmatprep.subr.bf16.mxu0 0
      %916 = vmatpush2.bf16.msra.mxu0 0
      %917 = vmatprep.subr.bf16.mxu0 0
      %918 = vmatpush2.bf16.msra.mxu0 0
      %919 = vmatprep.subr.bf16.mxu0 0
      %920 = vmatpush2.bf16.msra.mxu0 0
      %921 = vmatprep.subr.bf16.mxu0 0
      %922 = vmatpush2.bf16.msra.mxu0 0
      %923 = vmatprep.subr.bf16.mxu0 0
      %924 = vmatpush2.bf16.msra.mxu0 0
      %925 = vmatprep.subr.bf16.mxu0 0
      %926 = vmatpush2.bf16.msra.mxu0 0
      %927 = vmatprep.mubr.bf16.mxu0 0
      %928 = vmatmul.mubr.bf16.gmra.mxu0 %v869
      %v929 = vpop.f32.mrf.mxu0
      %v930 = vadd.f32 %v766, %v929
      %v931 = vpop.f32.mrf.mxu0
      %v932 = vpop.f32.mrf.mxu0
      %v933 = vadd.f32 %v769, %v932
      %v934 = vpop.f32.mrf.mxu0
      %935 = vmatprep.mubr.bf16.mxu0 0
      %936 = vmatmul.mubr.bf16.gmra.mxu0 %v872
      %v937 = vpop.f32.mrf.mxu0
      %v938 = vadd.f32 %v774, %v937
      %v939 = vpop.f32.mrf.mxu0
      %v940 = vpop.f32.mrf.mxu0
      %v941 = vadd.f32 %v777, %v940
      %v942 = vpop.f32.mrf.mxu0
      %943 = vmatprep.mubr.bf16.mxu0 0
      %944 = vmatmul.mubr.bf16.gmra.mxu0 %v875
      %v945 = vpop.f32.mrf.mxu0
      %v946 = vadd.f32 %v782, %v945
      %v947 = vpop.f32.mrf.mxu0
      %v948 = vpop.f32.mrf.mxu0
      %v949 = vadd.f32 %v785, %v948
      %v950 = vpop.f32.mrf.mxu0
      %951 = vmatprep.mubr.bf16.mxu0 0
      %952 = vmatmul.mubr.bf16.gmra.mxu0 %v878
      %v953 = vpop.f32.mrf.mxu0
      %v954 = vadd.f32 %v790, %v953
      %v955 = vpop.f32.mrf.mxu0
      %v956 = vpop.f32.mrf.mxu0
      %v957 = vadd.f32 %v793, %v956
      %v958 = vpop.f32.mrf.mxu0
      %959 = vmatprep.mubr.bf16.mxu0 0
      %960 = vmatmul.mubr.bf16.gmra.mxu0 %v881
      %v961 = vpop.f32.mrf.mxu0
      %v962 = vadd.f32 %v798, %v961
      %v963 = vpop.f32.mrf.mxu0
      %v964 = vpop.f32.mrf.mxu0
      %v965 = vadd.f32 %v801, %v964
      %v966 = vpop.f32.mrf.mxu0
      %967 = vmatprep.mubr.bf16.mxu0 0
      %968 = vmatmul.mubr.bf16.gmra.mxu0 %v884
      %v969 = vpop.f32.mrf.mxu0
      %v970 = vadd.f32 %v806, %v969
      %v971 = vpop.f32.mrf.mxu0
      %v972 = vpop.f32.mrf.mxu0
      %v973 = vadd.f32 %v809, %v972
      %v974 = vpop.f32.mrf.mxu0
      %975 = vmatprep.mubr.bf16.mxu0 0
      %976 = vmatmul.mubr.bf16.gmra.mxu0 %v887
      %v977 = vpop.f32.mrf.mxu0
      %v978 = vadd.f32 %v814, %v977
      %v979 = vpop.f32.mrf.mxu0
      %v980 = vpop.f32.mrf.mxu0
      %v981 = vadd.f32 %v817, %v980
      %v982 = vpop.f32.mrf.mxu0
      %983 = vmatprep.mubr.bf16.mxu0 0
      %984 = vmatmul.mubr.bf16.gmra.mxu0 %v890
      %v985 = vpop.f32.mrf.mxu0
      %v986 = vadd.f32 %v822, %v985
      %v987 = vpop.f32.mrf.mxu0
      %v988 = vpop.f32.mrf.mxu0
      %v989 = vadd.f32 %v825, %v988
      %v990 = vpop.f32.mrf.mxu0
      %991 = vdwg.mxu0
      %vm1000 = vcmask 1042432
      %vm1001 = vcmask 1046532
      %vm1002 = vmor %vm1000, %vm1001
      %v1003 = vrot.slane %v450, 5
      %v1004 = vrot.slane %v1003, 4
      %v1005 = vrot.slane %v451, 5
      %v1006 = vsel %vm1002, %v1004, %v1005
      %v1007 = vrot.slane %v1005, 4
      %v1008 = vrot.slane %v452, 5
      %v1009 = vsel %vm1002, %v1007, %v1008
      %v1010 = vrot.slane %v453, 5
      %v1011 = vrot.slane %v1010, 4
      %v1012 = vrot.slane %v454, 5
      %v1013 = vsel %vm1002, %v1011, %v1012
      %v1014 = vrot.slane %v1012, 4
      %v1015 = vrot.slane %v455, 5
      %v1016 = vsel %vm1002, %v1014, %v1015
      %v1017 = vrot.slane %v456, 5
      %v1018 = vrot.slane %v1017, 4
      %v1019 = vrot.slane %v457, 5
      %v1020 = vsel %vm1002, %v1018, %v1019
      %v1021 = vrot.slane %v1019, 4
      %v1022 = vrot.slane %v458, 5
      %v1023 = vsel %vm1002, %v1021, %v1022
      %v1024 = vrot.slane %v459, 5
      %v1025 = vrot.slane %v1024, 4
      %v1026 = vrot.slane %v460, 5
      %v1027 = vsel %vm1002, %v1025, %v1026
      %v1028 = vrot.slane %v1026, 4
      %v1029 = vrot.slane %v461, 5
      %v1030 = vsel %vm1002, %v1028, %v1029
      %v1031 = vrot.slane %v462, 5
      %v1032 = vrot.slane %v1031, 4
      %v1033 = vrot.slane %v463, 5
      %v1034 = vsel %vm1002, %v1032, %v1033
      %v1035 = vrot.slane %v1033, 4
      %v1036 = vrot.slane %v464, 5
      %v1037 = vsel %vm1002, %v1035, %v1036
      %v1038 = vrot.slane %v465, 5
      %v1039 = vrot.slane %v1038, 4
      %v1040 = vrot.slane %v466, 5
      %v1041 = vsel %vm1002, %v1039, %v1040
      %v1042 = vrot.slane %v1040, 4
      %v1043 = vrot.slane %v467, 5
      %v1044 = vsel %vm1002, %v1042, %v1043
      %v1045 = vrot.slane %v468, 5
      %v1046 = vrot.slane %v1045, 4
      %v1047 = vrot.slane %v469, 5
      %v1048 = vsel %vm1002, %v1046, %v1047
      %v1049 = vrot.slane %v1047, 4
      %v1050 = vrot.slane %v470, 5
      %v1051 = vsel %vm1002, %v1049, %v1050
      %v1052 = vrot.slane %v471, 5
      %v1053 = vrot.slane %v1052, 4
      %v1054 = vrot.slane %v472, 5
      %v1055 = vsel %vm1002, %v1053, %v1054
      %v1056 = vrot.slane %v1054, 4
      %v1057 = vrot.slane %v473, 5
      %v1058 = vsel %vm1002, %v1056, %v1057
      %s1059 = scalar_lea.vmem %s3, 4
      %v1060 = vld [vmem:[%s1059] sm:$0x3]
      %v1061 = vunpack.c.l.b16 %v1006
      %v1062 = vunpack.c.l.b16 %v1009
      %v1063 = vunpack.c.l.b16 %v1013
      %v1064 = vunpack.c.l.b16 %v1016
      %v1065 = vunpack.c.l.b16 %v1020
      %v1066 = vunpack.c.l.b16 %v1023
      %v1067 = vunpack.c.l.b16 %v1027
      %v1068 = vunpack.c.l.b16 %v1030
      %v1069 = vunpack.c.l.b16 %v1034
      %v1070 = vunpack.c.l.b16 %v1037
      %v1071 = vunpack.c.l.b16 %v1041
      %v1072 = vunpack.c.l.b16 %v1044
      %v1073 = vunpack.c.l.b16 %v1048
      %v1074 = vunpack.c.l.b16 %v1051
      %v1075 = vunpack.c.l.b16 %v1055
      %v1076 = vunpack.c.l.b16 %v1058
      %v1077 = vpack.c.b16 %v1062, %v1061
      %v1078 = vpack.c.b16 %v1064, %v1063
      %v1079 = vpack.c.b16 %v1066, %v1065
      %v1080 = vpack.c.b16 %v1068, %v1067
      %v1081 = vpack.c.b16 %v1070, %v1069
      %v1082 = vpack.c.b16 %v1072, %v1071
      %v1083 = vpack.c.b16 %v1074, %v1073
      %v1084 = vpack.c.b16 %v1076, %v1075
      %v1086 = vsel %vm702, %v1077, 0
      %v1089 = vsel %vm702, %v1078, 0
      %v1092 = vsel %vm702, %v1079, 0
      %v1095 = vsel %vm702, %v1080, 0
      %v1098 = vsel %vm702, %v1081, 0
      %v1101 = vsel %vm702, %v1082, 0
      %v1104 = vsel %vm702, %v1083, 0
      %v1107 = vsel %vm702, %v1084, 0
      %v1110 = vsel %vm727, %v1060, 0
      %1112 = vmatprep.subr.bf16.mxu0 0
      %1113 = vmatpush1.bf16.msra.mxu0 0
      %1114 = vmatprep.subr.bf16.mxu0 0
      %1115 = vmatpush1.bf16.msra.mxu0 0
      %1116 = vmatprep.subr.bf16.mxu0 0
      %1117 = vmatpush1.bf16.msra.mxu0 0
      %1118 = vmatprep.subr.bf16.mxu0 0
      %1119 = vmatpush1.bf16.msra.mxu0 0
      %1120 = vmatprep.subr.bf16.mxu0 0
      %1121 = vmatpush1.bf16.msra.mxu0 0
      %1122 = vmatprep.subr.bf16.mxu0 0
      %1123 = vmatpush1.bf16.msra.mxu0 0
      %1124 = vmatprep.subr.bf16.mxu0 0
      %1125 = vmatpush1.bf16.msra.mxu0 0
      %1126 = vmatprep.subr.bf16.mxu0 0
      %1127 = vmatpush1.bf16.msra.mxu0 %v1110
      %1128 = vmatprep.subr.bf16.mxu0 0
      %1129 = vmatpush2.bf16.msra.mxu0 0
      %1130 = vmatprep.subr.bf16.mxu0 0
      %1131 = vmatpush2.bf16.msra.mxu0 0
      %1132 = vmatprep.subr.bf16.mxu0 0
      %1133 = vmatpush2.bf16.msra.mxu0 0
      %1134 = vmatprep.subr.bf16.mxu0 0
      %1135 = vmatpush2.bf16.msra.mxu0 0
      %1136 = vmatprep.subr.bf16.mxu0 0
      %1137 = vmatpush2.bf16.msra.mxu0 0
      %1138 = vmatprep.subr.bf16.mxu0 0
      %1139 = vmatpush2.bf16.msra.mxu0 0
      %1140 = vmatprep.subr.bf16.mxu0 0
      %1141 = vmatpush2.bf16.msra.mxu0 0
      %1142 = vmatprep.subr.bf16.mxu0 0
      %1143 = vmatpush2.bf16.msra.mxu0 0
      %1144 = vmatprep.mubr.bf16.mxu0 0
      %1145 = vmatmul.mubr.bf16.gmra.mxu0 %v1086
      %v1146 = vpop.f32.mrf.mxu0
      %v1147 = vadd.f32 0.0, %v1146
      %v1148 = vpop.f32.mrf.mxu0
      %v1149 = vpop.f32.mrf.mxu0
      %v1150 = vadd.f32 0.0, %v1149
      %v1151 = vpop.f32.mrf.mxu0
      %1152 = vmatprep.mubr.bf16.mxu0 0
      %1153 = vmatmul.mubr.bf16.gmra.mxu0 %v1089
      %v1154 = vpop.f32.mrf.mxu0
      %v1155 = vadd.f32 0.0, %v1154
      %v1156 = vpop.f32.mrf.mxu0
      %v1157 = vpop.f32.mrf.mxu0
      %v1158 = vadd.f32 0.0, %v1157
      %v1159 = vpop.f32.mrf.mxu0
      %1160 = vmatprep.mubr.bf16.mxu0 0
      %1161 = vmatmul.mubr.bf16.gmra.mxu0 %v1092
      %v1162 = vpop.f32.mrf.mxu0
      %v1163 = vadd.f32 0.0, %v1162
      %v1164 = vpop.f32.mrf.mxu0
      %v1165 = vpop.f32.mrf.mxu0
      %v1166 = vadd.f32 0.0, %v1165
      %v1167 = vpop.f32.mrf.mxu0
      %1168 = vmatprep.mubr.bf16.mxu0 0
      %1169 = vmatmul.mubr.bf16.gmra.mxu0 %v1095
      %v1170 = vpop.f32.mrf.mxu0
      %v1171 = vadd.f32 0.0, %v1170
      %v1172 = vpop.f32.mrf.mxu0
      %v1173 = vpop.f32.mrf.mxu0
      %v1174 = vadd.f32 0.0, %v1173
      %v1175 = vpop.f32.mrf.mxu0
      %1176 = vmatprep.mubr.bf16.mxu0 0
      %1177 = vmatmul.mubr.bf16.gmra.mxu0 %v1098
      %v1178 = vpop.f32.mrf.mxu0
      %v1179 = vadd.f32 0.0, %v1178
      %v1180 = vpop.f32.mrf.mxu0
      %v1181 = vpop.f32.mrf.mxu0
      %v1182 = vadd.f32 0.0, %v1181
      %v1183 = vpop.f32.mrf.mxu0
      %1184 = vmatprep.mubr.bf16.mxu0 0
      %1185 = vmatmul.mubr.bf16.gmra.mxu0 %v1101
      %v1186 = vpop.f32.mrf.mxu0
      %v1187 = vadd.f32 0.0, %v1186
      %v1188 = vpop.f32.mrf.mxu0
      %v1189 = vpop.f32.mrf.mxu0
      %v1190 = vadd.f32 0.0, %v1189
      %v1191 = vpop.f32.mrf.mxu0
      %1192 = vmatprep.mubr.bf16.mxu0 0
      %1193 = vmatmul.mubr.bf16.gmra.mxu0 %v1104
      %v1194 = vpop.f32.mrf.mxu0
      %v1195 = vadd.f32 0.0, %v1194
      %v1196 = vpop.f32.mrf.mxu0
      %v1197 = vpop.f32.mrf.mxu0
      %v1198 = vadd.f32 0.0, %v1197
      %v1199 = vpop.f32.mrf.mxu0
      %1200 = vmatprep.mubr.bf16.mxu0 0
      %1201 = vmatmul.mubr.bf16.gmra.mxu0 %v1107
      %v1202 = vpop.f32.mrf.mxu0
      %v1203 = vadd.f32 0.0, %v1202
      %v1204 = vpop.f32.mrf.mxu0
      %v1205 = vpop.f32.mrf.mxu0
      %v1206 = vadd.f32 0.0, %v1205
      %v1207 = vpop.f32.mrf.mxu0
      %1208 = vdwg.mxu0
      %v1209 = vadd.f32 %v930, %v1147
      %v1210 = vadd.f32 %v933, %v1150
      %v1211 = vadd.f32 %v938, %v1155
      %v1212 = vadd.f32 %v941, %v1158
      %v1213 = vadd.f32 %v946, %v1163
      %v1214 = vadd.f32 %v949, %v1166
      %v1215 = vadd.f32 %v954, %v1171
      %v1216 = vadd.f32 %v957, %v1174
      %v1217 = vadd.f32 %v962, %v1179
      %v1218 = vadd.f32 %v965, %v1182
      %v1219 = vadd.f32 %v970, %v1187
      %v1220 = vadd.f32 %v973, %v1190
      %v1221 = vadd.f32 %v978, %v1195
      %v1222 = vadd.f32 %v981, %v1198
      %v1223 = vadd.f32 %v986, %v1203
      %v1224 = vadd.f32 %v989, %v1206
      %s1225 = scalar_lea.vmem %s3, 6
      %v1226 = vld [vmem:[%s1225] sm:$0x3]
      %v1229 = vunpack.c.l.b16 %v474
      %v1230 = vunpack.c.l.b16 %v475
      %v1231 = vpack.c.b16 %v1230, %v1229
      %v1233 = vsel %vm702, %v1231, 0
      %v1236 = vsel %vm727, %v1226, 0
      %1238 = vmatprep.subr.bf16.mxu0 0
      %1239 = vmatpush1.bf16.msra.mxu0 0
      %1240 = vmatprep.subr.bf16.mxu0 0
      %1241 = vmatpush1.bf16.msra.mxu0 0
      %1242 = vmatprep.subr.bf16.mxu0 0
      %1243 = vmatpush1.bf16.msra.mxu0 0
      %1244 = vmatprep.subr.bf16.mxu0 0
      %1245 = vmatpush1.bf16.msra.mxu0 0
      %1246 = vmatprep.subr.bf16.mxu0 0
      %1247 = vmatpush1.bf16.msra.mxu0 0
      %1248 = vmatprep.subr.bf16.mxu0 0
      %1249 = vmatpush1.bf16.msra.mxu0 0
      %1250 = vmatprep.subr.bf16.mxu0 0
      %1251 = vmatpush1.bf16.msra.mxu0 0
      %1252 = vmatprep.subr.bf16.mxu0 0
      %1253 = vmatpush1.bf16.msra.mxu0 %v1236
      %1254 = vmatprep.subr.bf16.mxu0 0
      %1255 = vmatpush2.bf16.msra.mxu0 0
      %1256 = vmatprep.subr.bf16.mxu0 0
      %1257 = vmatpush2.bf16.msra.mxu0 0
      %1258 = vmatprep.subr.bf16.mxu0 0
      %1259 = vmatpush2.bf16.msra.mxu0 0
      %1260 = vmatprep.subr.bf16.mxu0 0
      %1261 = vmatpush2.bf16.msra.mxu0 0
      %1262 = vmatprep.subr.bf16.mxu0 0
      %1263 = vmatpush2.bf16.msra.mxu0 0
      %1264 = vmatprep.subr.bf16.mxu0 0
      %1265 = vmatpush2.bf16.msra.mxu0 0
      %1266 = vmatprep.subr.bf16.mxu0 0
      %1267 = vmatpush2.bf16.msra.mxu0 0
      %1268 = vmatprep.subr.bf16.mxu0 0
      %1269 = vmatpush2.bf16.msra.mxu0 0
      %1270 = vmatprep.mubr.bf16.mxu0 0
      %1271 = vmatmul.mubr.bf16.gmra.mxu0 %v872
      %v1272 = vpop.f32.mrf.mxu0
      %v1273 = vadd.f32 0.0, %v1272
      %v1274 = vpop.f32.mrf.mxu0
      %v1275 = vpop.f32.mrf.mxu0
      %v1276 = vadd.f32 0.0, %v1275
      %v1277 = vpop.f32.mrf.mxu0
      %1278 = vmatprep.mubr.bf16.mxu0 0
      %1279 = vmatmul.mubr.bf16.gmra.mxu0 %v875
      %v1280 = vpop.f32.mrf.mxu0
      %v1281 = vadd.f32 0.0, %v1280
      %v1282 = vpop.f32.mrf.mxu0
      %v1283 = vpop.f32.mrf.mxu0
      %v1284 = vadd.f32 0.0, %v1283
      %v1285 = vpop.f32.mrf.mxu0
      %1286 = vmatprep.mubr.bf16.mxu0 0
      %1287 = vmatmul.mubr.bf16.gmra.mxu0 %v878
      %v1288 = vpop.f32.mrf.mxu0
      %v1289 = vadd.f32 0.0, %v1288
      %v1290 = vpop.f32.mrf.mxu0
      %v1291 = vpop.f32.mrf.mxu0
      %v1292 = vadd.f32 0.0, %v1291
      %v1293 = vpop.f32.mrf.mxu0
      %1294 = vmatprep.mubr.bf16.mxu0 0
      %1295 = vmatmul.mubr.bf16.gmra.mxu0 %v881
      %v1296 = vpop.f32.mrf.mxu0
      %v1297 = vadd.f32 0.0, %v1296
      %v1298 = vpop.f32.mrf.mxu0
      %v1299 = vpop.f32.mrf.mxu0
      %v1300 = vadd.f32 0.0, %v1299
      %v1301 = vpop.f32.mrf.mxu0
      %1302 = vmatprep.mubr.bf16.mxu0 0
      %1303 = vmatmul.mubr.bf16.gmra.mxu0 %v884
      %v1304 = vpop.f32.mrf.mxu0
      %v1305 = vadd.f32 0.0, %v1304
      %v1306 = vpop.f32.mrf.mxu0
      %v1307 = vpop.f32.mrf.mxu0
      %v1308 = vadd.f32 0.0, %v1307
      %v1309 = vpop.f32.mrf.mxu0
      %1310 = vmatprep.mubr.bf16.mxu0 0
      %1311 = vmatmul.mubr.bf16.gmra.mxu0 %v887
      %v1312 = vpop.f32.mrf.mxu0
      %v1313 = vadd.f32 0.0, %v1312
      %v1314 = vpop.f32.mrf.mxu0
      %v1315 = vpop.f32.mrf.mxu0
      %v1316 = vadd.f32 0.0, %v1315
      %v1317 = vpop.f32.mrf.mxu0
      %1318 = vmatprep.mubr.bf16.mxu0 0
      %1319 = vmatmul.mubr.bf16.gmra.mxu0 %v890
      %v1320 = vpop.f32.mrf.mxu0
      %v1321 = vadd.f32 0.0, %v1320
      %v1322 = vpop.f32.mrf.mxu0
      %v1323 = vpop.f32.mrf.mxu0
      %v1324 = vadd.f32 0.0, %v1323
      %v1325 = vpop.f32.mrf.mxu0
      %1326 = vmatprep.mubr.bf16.mxu0 0
      %1327 = vmatmul.mubr.bf16.gmra.mxu0 %v1233
      %v1328 = vpop.f32.mrf.mxu0
      %v1329 = vadd.f32 0.0, %v1328
      %v1330 = vpop.f32.mrf.mxu0
      %v1331 = vpop.f32.mrf.mxu0
      %v1332 = vadd.f32 0.0, %v1331
      %v1333 = vpop.f32.mrf.mxu0
      %1334 = vdwg.mxu0
      %v1335 = vadd.f32 %v1209, %v1273
      %v1336 = vadd.f32 %v1210, %v1276
      %v1337 = vadd.f32 %v1211, %v1281
      %v1338 = vadd.f32 %v1212, %v1284
      %v1339 = vadd.f32 %v1213, %v1289
      %v1340 = vadd.f32 %v1214, %v1292
      %v1341 = vadd.f32 %v1215, %v1297
      %v1342 = vadd.f32 %v1216, %v1300
      %v1343 = vadd.f32 %v1217, %v1305
      %v1344 = vadd.f32 %v1218, %v1308
      %v1345 = vadd.f32 %v1219, %v1313
      %v1346 = vadd.f32 %v1220, %v1316
      %v1347 = vadd.f32 %v1221, %v1321
      %v1348 = vadd.f32 %v1222, %v1324
      %v1349 = vadd.f32 %v1223, %v1329
      %v1350 = vadd.f32 %v1224, %v1332
      %v1352 = vshrl.u32 %v474, 16
      %v1354 = vrot.slane %v1352, 4
      %v1355 = vshll.u32 %v474, 16
      %v1357 = vrot.slane %v1355, 5
      %v1358 = vor.u32 %v1354, %v1357
      %v1359 = vrot.slane %v1358, 4
      %v1361 = vshll.u32 %v475, 16
      %v1363 = vrot.slane %v1361, 5
      %v1364 = vsel %vm483, %v1359, %v1363
      %v1365 = vshrl.u32 %v475, 16
      %v1367 = vrot.slane %v1365, 4
      %v1368 = vor.u32 %v1367, %v1363
      %v1369 = vrot.slane %v1368, 4
      %v1371 = vshll.u32 %v476, 16
      %v1373 = vrot.slane %v1371, 5
      %v1374 = vsel %vm483, %v1369, %v1373
      %s1375 = scalar_lea.vmem %s3, 8
      %v1376 = vld [vmem:[%s1375] sm:$0x3]
      %v1377 = vunpack.c.l.b16 %v1364
      %v1378 = vunpack.c.l.b16 %v1374
      %v1379 = vpack.c.b16 %v1378, %v1377
      %v1381 = vsel %vm702, %v1379, 0
      %v1384 = vsel %vm727, %v1376, 0
      %1386 = vmatprep.subr.bf16.mxu0 0
      %1387 = vmatpush1.bf16.msra.mxu0 0
      %1388 = vmatprep.subr.bf16.mxu0 0
      %1389 = vmatpush1.bf16.msra.mxu0 0
      %1390 = vmatprep.subr.bf16.mxu0 0
      %1391 = vmatpush1.bf16.msra.mxu0 0
      %1392 = vmatprep.subr.bf16.mxu0 0
      %1393 = vmatpush1.bf16.msra.mxu0 0
      %1394 = vmatprep.subr.bf16.mxu0 0
      %1395 = vmatpush1.bf16.msra.mxu0 0
      %1396 = vmatprep.subr.bf16.mxu0 0
      %1397 = vmatpush1.bf16.msra.mxu0 0
      %1398 = vmatprep.subr.bf16.mxu0 0
      %1399 = vmatpush1.bf16.msra.mxu0 0
      %1400 = vmatprep.subr.bf16.mxu0 0
      %1401 = vmatpush1.bf16.msra.mxu0 %v1384
      %1402 = vmatprep.subr.bf16.mxu0 0
      %1403 = vmatpush2.bf16.msra.mxu0 0
      %1404 = vmatprep.subr.bf16.mxu0 0
      %1405 = vmatpush2.bf16.msra.mxu0 0
      %1406 = vmatprep.subr.bf16.mxu0 0
      %1407 = vmatpush2.bf16.msra.mxu0 0
      %1408 = vmatprep.subr.bf16.mxu0 0
      %1409 = vmatpush2.bf16.msra.mxu0 0
      %1410 = vmatprep.subr.bf16.mxu0 0
      %1411 = vmatpush2.bf16.msra.mxu0 0
      %1412 = vmatprep.subr.bf16.mxu0 0
      %1413 = vmatpush2.bf16.msra.mxu0 0
      %1414 = vmatprep.subr.bf16.mxu0 0
      %1415 = vmatpush2.bf16.msra.mxu0 0
      %1416 = vmatprep.subr.bf16.mxu0 0
      %1417 = vmatpush2.bf16.msra.mxu0 0
      %1418 = vmatprep.mubr.bf16.mxu0 0
      %1419 = vmatmul.mubr.bf16.gmra.mxu0 %v707
      %v1420 = vpop.f32.mrf.mxu0
      %v1421 = vadd.f32 0.0, %v1420
      %v1422 = vpop.f32.mrf.mxu0
      %v1423 = vpop.f32.mrf.mxu0
      %v1424 = vadd.f32 0.0, %v1423
      %v1425 = vpop.f32.mrf.mxu0
      %1426 = vmatprep.mubr.bf16.mxu0 0
      %1427 = vmatmul.mubr.bf16.gmra.mxu0 %v710
      %v1428 = vpop.f32.mrf.mxu0
      %v1429 = vadd.f32 0.0, %v1428
      %v1430 = vpop.f32.mrf.mxu0
      %v1431 = vpop.f32.mrf.mxu0
      %v1432 = vadd.f32 0.0, %v1431
      %v1433 = vpop.f32.mrf.mxu0
      %1434 = vmatprep.mubr.bf16.mxu0 0
      %1435 = vmatmul.mubr.bf16.gmra.mxu0 %v713
      %v1436 = vpop.f32.mrf.mxu0
      %v1437 = vadd.f32 0.0, %v1436
      %v1438 = vpop.f32.mrf.mxu0
      %v1439 = vpop.f32.mrf.mxu0
      %v1440 = vadd.f32 0.0, %v1439
      %v1441 = vpop.f32.mrf.mxu0
      %1442 = vmatprep.mubr.bf16.mxu0 0
      %1443 = vmatmul.mubr.bf16.gmra.mxu0 %v716
      %v1444 = vpop.f32.mrf.mxu0
      %v1445 = vadd.f32 0.0, %v1444
      %v1446 = vpop.f32.mrf.mxu0
      %v1447 = vpop.f32.mrf.mxu0
      %v1448 = vadd.f32 0.0, %v1447
      %v1449 = vpop.f32.mrf.mxu0
      %1450 = vmatprep.mubr.bf16.mxu0 0
      %1451 = vmatmul.mubr.bf16.gmra.mxu0 %v719
      %v1452 = vpop.f32.mrf.mxu0
      %v1453 = vadd.f32 0.0, %v1452
      %v1454 = vpop.f32.mrf.mxu0
      %v1455 = vpop.f32.mrf.mxu0
      %v1456 = vadd.f32 0.0, %v1455
      %v1457 = vpop.f32.mrf.mxu0
      %1458 = vmatprep.mubr.bf16.mxu0 0
      %1459 = vmatmul.mubr.bf16.gmra.mxu0 %v722
      %v1460 = vpop.f32.mrf.mxu0
      %v1461 = vadd.f32 0.0, %v1460
      %v1462 = vpop.f32.mrf.mxu0
      %v1463 = vpop.f32.mrf.mxu0
      %v1464 = vadd.f32 0.0, %v1463
      %v1465 = vpop.f32.mrf.mxu0
      %1466 = vmatprep.mubr.bf16.mxu0 0
      %1467 = vmatmul.mubr.bf16.gmra.mxu0 %v725
      %v1468 = vpop.f32.mrf.mxu0
      %v1469 = vadd.f32 0.0, %v1468
      %v1470 = vpop.f32.mrf.mxu0
      %v1471 = vpop.f32.mrf.mxu0
      %v1472 = vadd.f32 0.0, %v1471
      %v1473 = vpop.f32.mrf.mxu0
      %1474 = vmatprep.mubr.bf16.mxu0 0
      %1475 = vmatmul.mubr.bf16.gmra.mxu0 %v1381
      %v1476 = vpop.f32.mrf.mxu0
      %v1477 = vadd.f32 0.0, %v1476
      %v1478 = vpop.f32.mrf.mxu0
      %v1479 = vpop.f32.mrf.mxu0
      %v1480 = vadd.f32 0.0, %v1479
      %v1481 = vpop.f32.mrf.mxu0
      %1482 = vdwg.mxu0
      %v1483 = vadd.f32 %v1335, %v1421
      %v1484 = vadd.f32 %v1336, %v1424
      %v1485 = vadd.f32 %v1337, %v1429
      %v1486 = vadd.f32 %v1338, %v1432
      %v1487 = vadd.f32 %v1339, %v1437
      %v1488 = vadd.f32 %v1340, %v1440
      %v1489 = vadd.f32 %v1341, %v1445
      %v1490 = vadd.f32 %v1342, %v1448
      %v1491 = vadd.f32 %v1343, %v1453
      %v1492 = vadd.f32 %v1344, %v1456
      %v1493 = vadd.f32 %v1345, %v1461
      %v1494 = vadd.f32 %v1346, %v1464
      %v1495 = vadd.f32 %v1347, %v1469
      %v1496 = vadd.f32 %v1348, %v1472
      %v1497 = vadd.f32 %v1349, %v1477
      %v1498 = vadd.f32 %v1350, %v1480
      %v1500 = vrot.slane %v474, 5
      %v1501 = vrot.slane %v1500, 4
      %v1502 = vrot.slane %v475, 5
      %v1503 = vsel %vm1002, %v1501, %v1502
      %v1504 = vrot.slane %v1502, 4
      %v1505 = vrot.slane %v476, 5
      %v1506 = vsel %vm1002, %v1504, %v1505
      %s1507 = scalar_lea.vmem %s3, 10
      %v1508 = vld [vmem:[%s1507] sm:$0x3]
      %v1509 = vunpack.c.l.b16 %v1503
      %v1510 = vunpack.c.l.b16 %v1506
      %v1511 = vpack.c.b16 %v1510, %v1509
      %v1513 = vsel %vm702, %v1511, 0
      %v1516 = vsel %vm727, %v1508, 0
      %1518 = vmatprep.subr.bf16.mxu0 0
      %1519 = vmatpush1.bf16.msra.mxu0 0
      %1520 = vmatprep.subr.bf16.mxu0 0
      %1521 = vmatpush1.bf16.msra.mxu0 0
      %1522 = vmatprep.subr.bf16.mxu0 0
      %1523 = vmatpush1.bf16.msra.mxu0 0
      %1524 = vmatprep.subr.bf16.mxu0 0
      %1525 = vmatpush1.bf16.msra.mxu0 0
      %1526 = vmatprep.subr.bf16.mxu0 0
      %1527 = vmatpush1.bf16.msra.mxu0 0
      %1528 = vmatprep.subr.bf16.mxu0 0
      %1529 = vmatpush1.bf16.msra.mxu0 0
      %1530 = vmatprep.subr.bf16.mxu0 0
      %1531 = vmatpush1.bf16.msra.mxu0 0
      %1532 = vmatprep.subr.bf16.mxu0 0
      %1533 = vmatpush1.bf16.msra.mxu0 %v1516
      %1534 = vmatprep.subr.bf16.mxu0 0
      %1535 = vmatpush2.bf16.msra.mxu0 0
      %1536 = vmatprep.subr.bf16.mxu0 0
      %1537 = vmatpush2.bf16.msra.mxu0 0
      %1538 = vmatprep.subr.bf16.mxu0 0
      %1539 = vmatpush2.bf16.msra.mxu0 0
      %1540 = vmatprep.subr.bf16.mxu0 0
      %1541 = vmatpush2.bf16.msra.mxu0 0
      %1542 = vmatprep.subr.bf16.mxu0 0
      %1543 = vmatpush2.bf16.msra.mxu0 0
      %1544 = vmatprep.subr.bf16.mxu0 0
      %1545 = vmatpush2.bf16.msra.mxu0 0
      %1546 = vmatprep.subr.bf16.mxu0 0
      %1547 = vmatpush2.bf16.msra.mxu0 0
      %1548 = vmatprep.subr.bf16.mxu0 0
      %1549 = vmatpush2.bf16.msra.mxu0 0
      %1550 = vmatprep.mubr.bf16.mxu0 0
      %1551 = vmatmul.mubr.bf16.gmra.mxu0 %v1089
      %v1552 = vpop.f32.mrf.mxu0
      %v1553 = vadd.f32 0.0, %v1552
      %v1554 = vpop.f32.mrf.mxu0
      %v1555 = vpop.f32.mrf.mxu0
      %v1556 = vadd.f32 0.0, %v1555
      %v1557 = vpop.f32.mrf.mxu0
      %1558 = vmatprep.mubr.bf16.mxu0 0
      %1559 = vmatmul.mubr.bf16.gmra.mxu0 %v1092
      %v1560 = vpop.f32.mrf.mxu0
      %v1561 = vadd.f32 0.0, %v1560
      %v1562 = vpop.f32.mrf.mxu0
      %v1563 = vpop.f32.mrf.mxu0
      %v1564 = vadd.f32 0.0, %v1563
      %v1565 = vpop.f32.mrf.mxu0
      %1566 = vmatprep.mubr.bf16.mxu0 0
      %1567 = vmatmul.mubr.bf16.gmra.mxu0 %v1095
      %v1568 = vpop.f32.mrf.mxu0
      %v1569 = vadd.f32 0.0, %v1568
      %v1570 = vpop.f32.mrf.mxu0
      %v1571 = vpop.f32.mrf.mxu0
      %v1572 = vadd.f32 0.0, %v1571
      %v1573 = vpop.f32.mrf.mxu0
      %1574 = vmatprep.mubr.bf16.mxu0 0
      %1575 = vmatmul.mubr.bf16.gmra.mxu0 %v1098
      %v1576 = vpop.f32.mrf.mxu0
      %v1577 = vadd.f32 0.0, %v1576
      %v1578 = vpop.f32.mrf.mxu0
      %v1579 = vpop.f32.mrf.mxu0
      %v1580 = vadd.f32 0.0, %v1579
      %v1581 = vpop.f32.mrf.mxu0
      %1582 = vmatprep.mubr.bf16.mxu0 0
      %1583 = vmatmul.mubr.bf16.gmra.mxu0 %v1101
      %v1584 = vpop.f32.mrf.mxu0
      %v1585 = vadd.f32 0.0, %v1584
      %v1586 = vpop.f32.mrf.mxu0
      %v1587 = vpop.f32.mrf.mxu0
      %v1588 = vadd.f32 0.0, %v1587
      %v1589 = vpop.f32.mrf.mxu0
      %1590 = vmatprep.mubr.bf16.mxu0 0
      %1591 = vmatmul.mubr.bf16.gmra.mxu0 %v1104
      %v1592 = vpop.f32.mrf.mxu0
      %v1593 = vadd.f32 0.0, %v1592
      %v1594 = vpop.f32.mrf.mxu0
      %v1595 = vpop.f32.mrf.mxu0
      %v1596 = vadd.f32 0.0, %v1595
      %v1597 = vpop.f32.mrf.mxu0
      %1598 = vmatprep.mubr.bf16.mxu0 0
      %1599 = vmatmul.mubr.bf16.gmra.mxu0 %v1107
      %v1600 = vpop.f32.mrf.mxu0
      %v1601 = vadd.f32 0.0, %v1600
      %v1602 = vpop.f32.mrf.mxu0
      %v1603 = vpop.f32.mrf.mxu0
      %v1604 = vadd.f32 0.0, %v1603
      %v1605 = vpop.f32.mrf.mxu0
      %1606 = vmatprep.mubr.bf16.mxu0 0
      %1607 = vmatmul.mubr.bf16.gmra.mxu0 %v1513
      %v1608 = vpop.f32.mrf.mxu0
      %v1609 = vadd.f32 0.0, %v1608
      %v1610 = vpop.f32.mrf.mxu0
      %v1611 = vpop.f32.mrf.mxu0
      %v1612 = vadd.f32 0.0, %v1611
      %v1613 = vpop.f32.mrf.mxu0
      %1614 = vdwg.mxu0
      %v1615 = vadd.f32 %v1483, %v1553
      %v1616 = vadd.f32 %v1484, %v1556
      %v1617 = vadd.f32 %v1485, %v1561
      %v1618 = vadd.f32 %v1486, %v1564
      %v1619 = vadd.f32 %v1487, %v1569
      %v1620 = vadd.f32 %v1488, %v1572
      %v1621 = vadd.f32 %v1489, %v1577
      %v1622 = vadd.f32 %v1490, %v1580
      %v1623 = vadd.f32 %v1491, %v1585
      %v1624 = vadd.f32 %v1492, %v1588
      %v1625 = vadd.f32 %v1493, %v1593
      %v1626 = vadd.f32 %v1494, %v1596
      %v1627 = vadd.f32 %v1495, %v1601
      %v1628 = vadd.f32 %v1496, %v1604
      %v1629 = vadd.f32 %v1497, %v1609
      %v1630 = vadd.f32 %v1498, %v1612
      %s1631 = scalar_lea.vmem %s3, 12
      %v1632 = vld [vmem:[%s1631] sm:$0x3]
      %v1635 = vunpack.c.l.b16 %v477
      %v1636 = vunpack.c.l.b16 %v478
      %v1637 = vpack.c.b16 %v1636, %v1635
      %v1639 = vsel %vm702, %v1637, 0
      %v1642 = vsel %vm727, %v1632, 0
      %1644 = vmatprep.subr.bf16.mxu0 0
      %1645 = vmatpush1.bf16.msra.mxu0 0
      %1646 = vmatprep.subr.bf16.mxu0 0
      %1647 = vmatpush1.bf16.msra.mxu0 0
      %1648 = vmatprep.subr.bf16.mxu0 0
      %1649 = vmatpush1.bf16.msra.mxu0 0
      %1650 = vmatprep.subr.bf16.mxu0 0
      %1651 = vmatpush1.bf16.msra.mxu0 0
      %1652 = vmatprep.subr.bf16.mxu0 0
      %1653 = vmatpush1.bf16.msra.mxu0 0
      %1654 = vmatprep.subr.bf16.mxu0 0
      %1655 = vmatpush1.bf16.msra.mxu0 0
      %1656 = vmatprep.subr.bf16.mxu0 0
      %1657 = vmatpush1.bf16.msra.mxu0 0
      %1658 = vmatprep.subr.bf16.mxu0 0
      %1659 = vmatpush1.bf16.msra.mxu0 %v1642
      %1660 = vmatprep.subr.bf16.mxu0 0
      %1661 = vmatpush2.bf16.msra.mxu0 0
      %1662 = vmatprep.subr.bf16.mxu0 0
      %1663 = vmatpush2.bf16.msra.mxu0 0
      %1664 = vmatprep.subr.bf16.mxu0 0
      %1665 = vmatpush2.bf16.msra.mxu0 0
      %1666 = vmatprep.subr.bf16.mxu0 0
      %1667 = vmatpush2.bf16.msra.mxu0 0
      %1668 = vmatprep.subr.bf16.mxu0 0
      %1669 = vmatpush2.bf16.msra.mxu0 0
      %1670 = vmatprep.subr.bf16.mxu0 0
      %1671 = vmatpush2.bf16.msra.mxu0 0
      %1672 = vmatprep.subr.bf16.mxu0 0
      %1673 = vmatpush2.bf16.msra.mxu0 0
      %1674 = vmatprep.subr.bf16.mxu0 0
      %1675 = vmatpush2.bf16.msra.mxu0 0
      %1676 = vmatprep.mubr.bf16.mxu0 0
      %1677 = vmatmul.mubr.bf16.gmra.mxu0 %v875
      %v1678 = vpop.f32.mrf.mxu0
      %v1679 = vadd.f32 0.0, %v1678
      %v1680 = vpop.f32.mrf.mxu0
      %v1681 = vpop.f32.mrf.mxu0
      %v1682 = vadd.f32 0.0, %v1681
      %v1683 = vpop.f32.mrf.mxu0
      %1684 = vmatprep.mubr.bf16.mxu0 0
      %1685 = vmatmul.mubr.bf16.gmra.mxu0 %v878
      %v1686 = vpop.f32.mrf.mxu0
      %v1687 = vadd.f32 0.0, %v1686
      %v1688 = vpop.f32.mrf.mxu0
      %v1689 = vpop.f32.mrf.mxu0
      %v1690 = vadd.f32 0.0, %v1689
      %v1691 = vpop.f32.mrf.mxu0
      %1692 = vmatprep.mubr.bf16.mxu0 0
      %1693 = vmatmul.mubr.bf16.gmra.mxu0 %v881
      %v1694 = vpop.f32.mrf.mxu0
      %v1695 = vadd.f32 0.0, %v1694
      %v1696 = vpop.f32.mrf.mxu0
      %v1697 = vpop.f32.mrf.mxu0
      %v1698 = vadd.f32 0.0, %v1697
      %v1699 = vpop.f32.mrf.mxu0
      %1700 = vmatprep.mubr.bf16.mxu0 0
      %1701 = vmatmul.mubr.bf16.gmra.mxu0 %v884
      %v1702 = vpop.f32.mrf.mxu0
      %v1703 = vadd.f32 0.0, %v1702
      %v1704 = vpop.f32.mrf.mxu0
      %v1705 = vpop.f32.mrf.mxu0
      %v1706 = vadd.f32 0.0, %v1705
      %v1707 = vpop.f32.mrf.mxu0
      %1708 = vmatprep.mubr.bf16.mxu0 0
      %1709 = vmatmul.mubr.bf16.gmra.mxu0 %v887
      %v1710 = vpop.f32.mrf.mxu0
      %v1711 = vadd.f32 0.0, %v1710
      %v1712 = vpop.f32.mrf.mxu0
      %v1713 = vpop.f32.mrf.mxu0
      %v1714 = vadd.f32 0.0, %v1713
      %v1715 = vpop.f32.mrf.mxu0
      %1716 = vmatprep.mubr.bf16.mxu0 0
      %1717 = vmatmul.mubr.bf16.gmra.mxu0 %v890
      %v1718 = vpop.f32.mrf.mxu0
      %v1719 = vadd.f32 0.0, %v1718
      %v1720 = vpop.f32.mrf.mxu0
      %v1721 = vpop.f32.mrf.mxu0
      %v1722 = vadd.f32 0.0, %v1721
      %v1723 = vpop.f32.mrf.mxu0
      %1724 = vmatprep.mubr.bf16.mxu0 0
      %1725 = vmatmul.mubr.bf16.gmra.mxu0 %v1233
      %v1726 = vpop.f32.mrf.mxu0
      %v1727 = vadd.f32 0.0, %v1726
      %v1728 = vpop.f32.mrf.mxu0
      %v1729 = vpop.f32.mrf.mxu0
      %v1730 = vadd.f32 0.0, %v1729
      %v1731 = vpop.f32.mrf.mxu0
      %1732 = vmatprep.mubr.bf16.mxu0 0
      %1733 = vmatmul.mubr.bf16.gmra.mxu0 %v1639
      %v1734 = vpop.f32.mrf.mxu0
      %v1735 = vadd.f32 0.0, %v1734
      %v1736 = vpop.f32.mrf.mxu0
      %v1737 = vpop.f32.mrf.mxu0
      %v1738 = vadd.f32 0.0, %v1737
      %v1739 = vpop.f32.mrf.mxu0
      %1740 = vdwg.mxu0
      %v1741 = vadd.f32 %v1615, %v1679
      %v1742 = vadd.f32 %v1616, %v1682
      %v1743 = vadd.f32 %v1617, %v1687
      %v1744 = vadd.f32 %v1618, %v1690
      %v1745 = vadd.f32 %v1619, %v1695
      %v1746 = vadd.f32 %v1620, %v1698
      %v1747 = vadd.f32 %v1621, %v1703
      %v1748 = vadd.f32 %v1622, %v1706
      %v1749 = vadd.f32 %v1623, %v1711
      %v1750 = vadd.f32 %v1624, %v1714
      %v1751 = vadd.f32 %v1625, %v1719
      %v1752 = vadd.f32 %v1626, %v1722
      %v1753 = vadd.f32 %v1627, %v1727
      %v1754 = vadd.f32 %v1628, %v1730
      %v1755 = vadd.f32 %v1629, %v1735
      %v1756 = vadd.f32 %v1630, %v1738
      %v1758 = vshrl.u32 %v477, 16
      %v1760 = vrot.slane %v1758, 4
      %v1761 = vshll.u32 %v477, 16
      %v1763 = vrot.slane %v1761, 5
      %v1764 = vor.u32 %v1760, %v1763
      %v1765 = vrot.slane %v1764, 4
      %v1767 = vshll.u32 %v478, 16
      %v1769 = vrot.slane %v1767, 5
      %v1770 = vsel %vm483, %v1765, %v1769
      %v1771 = vshrl.u32 %v478, 16
      %v1773 = vrot.slane %v1771, 4
      %v1774 = vor.u32 %v1773, %v1769
      %v1775 = vrot.slane %v1774, 4
      %v1777 = vshll.u32 %v479, 16
      %v1779 = vrot.slane %v1777, 5
      %v1780 = vsel %vm483, %v1775, %v1779
      %s1781 = scalar_lea.vmem %s3, 14
      %v1782 = vld [vmem:[%s1781] sm:$0x3]
      %v1783 = vunpack.c.l.b16 %v1770
      %v1784 = vunpack.c.l.b16 %v1780
      %v1785 = vpack.c.b16 %v1784, %v1783
      %v1787 = vsel %vm702, %v1785, 0
      %v1790 = vsel %vm727, %v1782, 0
      %1792 = vmatprep.subr.bf16.mxu0 0
      %1793 = vmatpush1.bf16.msra.mxu0 0
      %1794 = vmatprep.subr.bf16.mxu0 0
      %1795 = vmatpush1.bf16.msra.mxu0 0
      %1796 = vmatprep.subr.bf16.mxu0 0
      %1797 = vmatpush1.bf16.msra.mxu0 0
      %1798 = vmatprep.subr.bf16.mxu0 0
      %1799 = vmatpush1.bf16.msra.mxu0 0
      %1800 = vmatprep.subr.bf16.mxu0 0
      %1801 = vmatpush1.bf16.msra.mxu0 0
      %1802 = vmatprep.subr.bf16.mxu0 0
      %1803 = vmatpush1.bf16.msra.mxu0 0
      %1804 = vmatprep.subr.bf16.mxu0 0
      %1805 = vmatpush1.bf16.msra.mxu0 0
      %1806 = vmatprep.subr.bf16.mxu0 0
      %1807 = vmatpush1.bf16.msra.mxu0 %v1790
      %1808 = vmatprep.subr.bf16.mxu0 0
      %1809 = vmatpush2.bf16.msra.mxu0 0
      %1810 = vmatprep.subr.bf16.mxu0 0
      %1811 = vmatpush2.bf16.msra.mxu0 0
      %1812 = vmatprep.subr.bf16.mxu0 0
      %1813 = vmatpush2.bf16.msra.mxu0 0
      %1814 = vmatprep.subr.bf16.mxu0 0
      %1815 = vmatpush2.bf16.msra.mxu0 0
      %1816 = vmatprep.subr.bf16.mxu0 0
      %1817 = vmatpush2.bf16.msra.mxu0 0
      %1818 = vmatprep.subr.bf16.mxu0 0
      %1819 = vmatpush2.bf16.msra.mxu0 0
      %1820 = vmatprep.subr.bf16.mxu0 0
      %1821 = vmatpush2.bf16.msra.mxu0 0
      %1822 = vmatprep.subr.bf16.mxu0 0
      %1823 = vmatpush2.bf16.msra.mxu0 0
      %1824 = vmatprep.mubr.bf16.mxu0 0
      %1825 = vmatmul.mubr.bf16.gmra.mxu0 %v710
      %v1826 = vpop.f32.mrf.mxu0
      %v1827 = vadd.f32 0.0, %v1826
      %v1828 = vpop.f32.mrf.mxu0
      %v1829 = vpop.f32.mrf.mxu0
      %v1830 = vadd.f32 0.0, %v1829
      %v1831 = vpop.f32.mrf.mxu0
      %1832 = vmatprep.mubr.bf16.mxu0 0
      %1833 = vmatmul.mubr.bf16.gmra.mxu0 %v713
      %v1834 = vpop.f32.mrf.mxu0
      %v1835 = vadd.f32 0.0, %v1834
      %v1836 = vpop.f32.mrf.mxu0
      %v1837 = vpop.f32.mrf.mxu0
      %v1838 = vadd.f32 0.0, %v1837
      %v1839 = vpop.f32.mrf.mxu0
      %1840 = vmatprep.mubr.bf16.mxu0 0
      %1841 = vmatmul.mubr.bf16.gmra.mxu0 %v716
      %v1842 = vpop.f32.mrf.mxu0
      %v1843 = vadd.f32 0.0, %v1842
      %v1844 = vpop.f32.mrf.mxu0
      %v1845 = vpop.f32.mrf.mxu0
      %v1846 = vadd.f32 0.0, %v1845
      %v1847 = vpop.f32.mrf.mxu0
      %1848 = vmatprep.mubr.bf16.mxu0 0
      %1849 = vmatmul.mubr.bf16.gmra.mxu0 %v719
      %v1850 = vpop.f32.mrf.mxu0
      %v1851 = vadd.f32 0.0, %v1850
      %v1852 = vpop.f32.mrf.mxu0
      %v1853 = vpop.f32.mrf.mxu0
      %v1854 = vadd.f32 0.0, %v1853
      %v1855 = vpop.f32.mrf.mxu0
      %1856 = vmatprep.mubr.bf16.mxu0 0
      %1857 = vmatmul.mubr.bf16.gmra.mxu0 %v722
      %v1858 = vpop.f32.mrf.mxu0
      %v1859 = vadd.f32 0.0, %v1858
      %v1860 = vpop.f32.mrf.mxu0
      %v1861 = vpop.f32.mrf.mxu0
      %v1862 = vadd.f32 0.0, %v1861
      %v1863 = vpop.f32.mrf.mxu0
      %1864 = vmatprep.mubr.bf16.mxu0 0
      %1865 = vmatmul.mubr.bf16.gmra.mxu0 %v725
      %v1866 = vpop.f32.mrf.mxu0
      %v1867 = vadd.f32 0.0, %v1866
      %v1868 = vpop.f32.mrf.mxu0
      %v1869 = vpop.f32.mrf.mxu0
      %v1870 = vadd.f32 0.0, %v1869
      %v1871 = vpop.f32.mrf.mxu0
      %1872 = vmatprep.mubr.bf16.mxu0 0
      %1873 = vmatmul.mubr.bf16.gmra.mxu0 %v1381
      %v1874 = vpop.f32.mrf.mxu0
      %v1875 = vadd.f32 0.0, %v1874
      %v1876 = vpop.f32.mrf.mxu0
      %v1877 = vpop.f32.mrf.mxu0
      %v1878 = vadd.f32 0.0, %v1877
      %v1879 = vpop.f32.mrf.mxu0
      %1880 = vmatprep.mubr.bf16.mxu0 0
      %1881 = vmatmul.mubr.bf16.gmra.mxu0 %v1787
      %v1882 = vpop.f32.mrf.mxu0
      %v1883 = vadd.f32 0.0, %v1882
      %v1884 = vpop.f32.mrf.mxu0
      %v1885 = vpop.f32.mrf.mxu0
      %v1886 = vadd.f32 0.0, %v1885
      %v1887 = vpop.f32.mrf.mxu0
      %1888 = vdwg.mxu0
      %v1889 = vadd.f32 %v1741, %v1827
      %v1890 = vadd.f32 %v1742, %v1830
      %v1891 = vadd.f32 %v1743, %v1835
      %v1892 = vadd.f32 %v1744, %v1838
      %v1893 = vadd.f32 %v1745, %v1843
      %v1894 = vadd.f32 %v1746, %v1846
      %v1895 = vadd.f32 %v1747, %v1851
      %v1896 = vadd.f32 %v1748, %v1854
      %v1897 = vadd.f32 %v1749, %v1859
      %v1898 = vadd.f32 %v1750, %v1862
      %v1899 = vadd.f32 %v1751, %v1867
      %v1900 = vadd.f32 %v1752, %v1870
      %v1901 = vadd.f32 %v1753, %v1875
      %v1902 = vadd.f32 %v1754, %v1878
      %v1903 = vadd.f32 %v1755, %v1883
      %v1904 = vadd.f32 %v1756, %v1886
      %v1906 = vrot.slane %v477, 5
      %v1907 = vrot.slane %v1906, 4
      %v1908 = vrot.slane %v478, 5
      %v1909 = vsel %vm1002, %v1907, %v1908
      %v1910 = vrot.slane %v1908, 4
      %v1911 = vrot.slane %v479, 5
      %v1912 = vsel %vm1002, %v1910, %v1911
      %s1913 = scalar_lea.vmem %s3, 16
      %v1914 = vld [vmem:[%s1913] sm:$0x3]
      %v1915 = vunpack.c.l.b16 %v1909
      %v1916 = vunpack.c.l.b16 %v1912
      %v1917 = vpack.c.b16 %v1916, %v1915
      %v1919 = vsel %vm702, %v1917, 0
      %v1922 = vsel %vm727, %v1914, 0
      %1924 = vmatprep.subr.bf16.mxu0 0
      %1925 = vmatpush1.bf16.msra.mxu0 0
      %1926 = vmatprep.subr.bf16.mxu0 0
      %1927 = vmatpush1.bf16.msra.mxu0 0
      %1928 = vmatprep.subr.bf16.mxu0 0
      %1929 = vmatpush1.bf16.msra.mxu0 0
      %1930 = vmatprep.subr.bf16.mxu0 0
      %1931 = vmatpush1.bf16.msra.mxu0 0
      %1932 = vmatprep.subr.bf16.mxu0 0
      %1933 = vmatpush1.bf16.msra.mxu0 0
      %1934 = vmatprep.subr.bf16.mxu0 0
      %1935 = vmatpush1.bf16.msra.mxu0 0
      %1936 = vmatprep.subr.bf16.mxu0 0
      %1937 = vmatpush1.bf16.msra.mxu0 0
      %1938 = vmatprep.subr.bf16.mxu0 0
      %1939 = vmatpush1.bf16.msra.mxu0 %v1922
      %1940 = vmatprep.subr.bf16.mxu0 0
      %1941 = vmatpush2.bf16.msra.mxu0 0
      %1942 = vmatprep.subr.bf16.mxu0 0
      %1943 = vmatpush2.bf16.msra.mxu0 0
      %1944 = vmatprep.subr.bf16.mxu0 0
      %1945 = vmatpush2.bf16.msra.mxu0 0
      %1946 = vmatprep.subr.bf16.mxu0 0
      %1947 = vmatpush2.bf16.msra.mxu0 0
      %1948 = vmatprep.subr.bf16.mxu0 0
      %1949 = vmatpush2.bf16.msra.mxu0 0
      %1950 = vmatprep.subr.bf16.mxu0 0
      %1951 = vmatpush2.bf16.msra.mxu0 0
      %1952 = vmatprep.subr.bf16.mxu0 0
      %1953 = vmatpush2.bf16.msra.mxu0 0
      %1954 = vmatprep.subr.bf16.mxu0 0
      %1955 = vmatpush2.bf16.msra.mxu0 0
      %1956 = vmatprep.mubr.bf16.mxu0 0
      %1957 = vmatmul.mubr.bf16.gmra.mxu0 %v1092
      %v1958 = vpop.f32.mrf.mxu0
      %v1959 = vadd.f32 0.0, %v1958
      %v1960 = vpop.f32.mrf.mxu0
      %v1961 = vpop.f32.mrf.mxu0
      %v1962 = vadd.f32 0.0, %v1961
      %v1963 = vpop.f32.mrf.mxu0
      %1964 = vmatprep.mubr.bf16.mxu0 0
      %1965 = vmatmul.mubr.bf16.gmra.mxu0 %v1095
      %v1966 = vpop.f32.mrf.mxu0
      %v1967 = vadd.f32 0.0, %v1966
      %v1968 = vpop.f32.mrf.mxu0
      %v1969 = vpop.f32.mrf.mxu0
      %v1970 = vadd.f32 0.0, %v1969
      %v1971 = vpop.f32.mrf.mxu0
      %1972 = vmatprep.mubr.bf16.mxu0 0
      %1973 = vmatmul.mubr.bf16.gmra.mxu0 %v1098
      %v1974 = vpop.f32.mrf.mxu0
      %v1975 = vadd.f32 0.0, %v1974
      %v1976 = vpop.f32.mrf.mxu0
      %v1977 = vpop.f32.mrf.mxu0
      %v1978 = vadd.f32 0.0, %v1977
      %v1979 = vpop.f32.mrf.mxu0
      %1980 = vmatprep.mubr.bf16.mxu0 0
      %1981 = vmatmul.mubr.bf16.gmra.mxu0 %v1101
      %v1982 = vpop.f32.mrf.mxu0
      %v1983 = vadd.f32 0.0, %v1982
      %v1984 = vpop.f32.mrf.mxu0
      %v1985 = vpop.f32.mrf.mxu0
      %v1986 = vadd.f32 0.0, %v1985
      %v1987 = vpop.f32.mrf.mxu0
      %1988 = vmatprep.mubr.bf16.mxu0 0
      %1989 = vmatmul.mubr.bf16.gmra.mxu0 %v1104
      %v1990 = vpop.f32.mrf.mxu0
      %v1991 = vadd.f32 0.0, %v1990
      %v1992 = vpop.f32.mrf.mxu0
      %v1993 = vpop.f32.mrf.mxu0
      %v1994 = vadd.f32 0.0, %v1993
      %v1995 = vpop.f32.mrf.mxu0
      %1996 = vmatprep.mubr.bf16.mxu0 0
      %1997 = vmatmul.mubr.bf16.gmra.mxu0 %v1107
      %v1998 = vpop.f32.mrf.mxu0
      %v1999 = vadd.f32 0.0, %v1998
      %v2000 = vpop.f32.mrf.mxu0
      %v2001 = vpop.f32.mrf.mxu0
      %v2002 = vadd.f32 0.0, %v2001
      %v2003 = vpop.f32.mrf.mxu0
      %2004 = vmatprep.mubr.bf16.mxu0 0
      %2005 = vmatmul.mubr.bf16.gmra.mxu0 %v1513
      %v2006 = vpop.f32.mrf.mxu0
      %v2007 = vadd.f32 0.0, %v2006
      %v2008 = vpop.f32.mrf.mxu0
      %v2009 = vpop.f32.mrf.mxu0
      %v2010 = vadd.f32 0.0, %v2009
      %v2011 = vpop.f32.mrf.mxu0
      %2012 = vmatprep.mubr.bf16.mxu0 0
      %2013 = vmatmul.mubr.bf16.gmra.mxu0 %v1919
      %v2014 = vpop.f32.mrf.mxu0
      %v2015 = vadd.f32 0.0, %v2014
      %v2016 = vpop.f32.mrf.mxu0
      %v2017 = vpop.f32.mrf.mxu0
      %v2018 = vadd.f32 0.0, %v2017
      %v2019 = vpop.f32.mrf.mxu0
      %2020 = vdwg.mxu0
      %v2021 = vadd.f32 %v1889, %v1959
      %v2022 = vadd.f32 %v1890, %v1962
      %v2023 = vadd.f32 %v1891, %v1967
      %v2024 = vadd.f32 %v1892, %v1970
      %v2025 = vadd.f32 %v1893, %v1975
      %v2026 = vadd.f32 %v1894, %v1978
      %v2027 = vadd.f32 %v1895, %v1983
      %v2028 = vadd.f32 %v1896, %v1986
      %v2029 = vadd.f32 %v1897, %v1991
      %v2030 = vadd.f32 %v1898, %v1994
      %v2031 = vadd.f32 %v1899, %v1999
      %v2032 = vadd.f32 %v1900, %v2002
      %v2033 = vadd.f32 %v1901, %v2007
      %v2034 = vadd.f32 %v1902, %v2010
      %v2035 = vadd.f32 %v1903, %v2015
      %v2036 = vadd.f32 %v1904, %v2018
      %v2037 = vld [vmem:[%s4] sm:$0x1]
      %v2039 = vlaneseq
      %v2040 = vshrl.u32 %v2039, 7
      %v2041 = vsub.s32 0, %v2040
      %v2042 = vrot.slane %v2037, %v2041
      %v2044 = vadd.f32 %v2021, %v2042
      %v2045 = vadd.f32 %v2022, %v2042
      %v2046 = vadd.f32 %v2023, %v2042
      %v2047 = vadd.f32 %v2024, %v2042
      %v2048 = vadd.f32 %v2025, %v2042
      %v2049 = vadd.f32 %v2026, %v2042
      %v2050 = vadd.f32 %v2027, %v2042
      %v2051 = vadd.f32 %v2028, %v2042
      %v2052 = vadd.f32 %v2029, %v2042
      %v2053 = vadd.f32 %v2030, %v2042
      %v2054 = vadd.f32 %v2031, %v2042
      %v2055 = vadd.f32 %v2032, %v2042
      %v2056 = vadd.f32 %v2033, %v2042
      %v2057 = vadd.f32 %v2034, %v2042
      %v2058 = vadd.f32 %v2035, %v2042
      %v2059 = vadd.f32 %v2036, %v2042
      %v2060 = vmax.f32 %v2044, 0.0
      %v2061 = vmax.f32 %v2045, 0.0
      %v2062 = vmax.f32 %v2046, 0.0
      %v2063 = vmax.f32 %v2047, 0.0
      %v2064 = vmax.f32 %v2048, 0.0
      %v2065 = vmax.f32 %v2049, 0.0
      %v2066 = vmax.f32 %v2050, 0.0
      %v2067 = vmax.f32 %v2051, 0.0
      %v2068 = vmax.f32 %v2052, 0.0
      %v2069 = vmax.f32 %v2053, 0.0
      %v2070 = vmax.f32 %v2054, 0.0
      %v2071 = vmax.f32 %v2055, 0.0
      %v2072 = vmax.f32 %v2056, 0.0
      %v2073 = vmax.f32 %v2057, 0.0
      %v2074 = vmax.f32 %v2058, 0.0
      %v2075 = vmax.f32 %v2059, 0.0
      %v2076 = vpack.c.bf16 %v2061, %v2060
      %v2077 = vpack.c.bf16 %v2063, %v2062
      %v2078 = vpack.c.bf16 %v2065, %v2064
      %v2079 = vpack.c.bf16 %v2067, %v2066
      %v2080 = vpack.c.bf16 %v2069, %v2068
      %v2081 = vpack.c.bf16 %v2071, %v2070
      %v2082 = vpack.c.bf16 %v2073, %v2072
      %v2083 = vpack.c.bf16 %v2075, %v2074
      %v2084 = vld [vmem:[%s5] sm:$0xf]
      %v2085 = vld [vmem:[%s5 + $0x4] sm:$0xf]
      %v2086 = vld [vmem:[%s5 + $0x8] sm:$0xf]
      %v2087 = vld [vmem:[%s5 + $0xc] sm:$0xf]
      %v2088 = vld [vmem:[%s5 + $0x10] sm:$0xf]
      %v2089 = vld [vmem:[%s5 + $0x14] sm:$0xf]
      %v2090 = vld [vmem:[%s5 + $0x18] sm:$0xf]
      %v2091 = vld [vmem:[%s5 + $0x1c] sm:$0xf]
      %v2092 = vld [vmem:[%s5 + $0x20] sm:$0xf]
      %v2093 = vld [vmem:[%s5 + $0x24] sm:$0xf]
      %v2094 = vld [vmem:[%s5 + $0x28] sm:$0xf]
      %v2095 = vld [vmem:[%s5 + $0x2c] sm:$0xf]
      %v2096 = vld [vmem:[%s5 + $0x30] sm:$0xf]
      %v2097 = vld [vmem:[%s5 + $0x34] sm:$0xf]
      %v2098 = vld [vmem:[%s5 + $0x38] sm:$0xf]
      %v2099 = vld [vmem:[%s5 + $0x3c] sm:$0xf]
      %v2100 = vld [vmem:[%s6] sm:$0x1]
      %v2102 = vlaneseq
      %v2103 = vshrl.u32 %v2102, 7
      %v2104 = vsub.s32 0, %v2103
      %v2105 = vrot.slane %v2100, %v2104
      %v2123 = vunpack.c.l.b16 %v2084
      %v2124 = vunpack.c.l.b16 %v2085
      %v2125 = vunpack.c.l.b16 %v2086
      %v2126 = vunpack.c.l.b16 %v2087
      %v2127 = vunpack.c.l.b16 %v2088
      %v2128 = vunpack.c.l.b16 %v2089
      %v2129 = vunpack.c.l.b16 %v2090
      %v2130 = vunpack.c.l.b16 %v2091
      %v2131 = vunpack.c.l.b16 %v2092
      %v2132 = vunpack.c.l.b16 %v2093
      %v2133 = vunpack.c.l.b16 %v2094
      %v2134 = vunpack.c.l.b16 %v2095
      %v2135 = vunpack.c.l.b16 %v2096
      %v2136 = vunpack.c.l.b16 %v2097
      %v2137 = vunpack.c.l.b16 %v2098
      %v2138 = vunpack.c.l.b16 %v2099
      %v2139 = vpack.c.b16 %v2124, %v2123
      %v2140 = vpack.c.b16 %v2126, %v2125
      %v2141 = vpack.c.b16 %v2128, %v2127
      %v2142 = vpack.c.b16 %v2130, %v2129
      %v2143 = vpack.c.b16 %v2132, %v2131
      %v2144 = vpack.c.b16 %v2134, %v2133
      %v2145 = vpack.c.b16 %v2136, %v2135
      %v2146 = vpack.c.b16 %v2138, %v2137
      %2155 = vmatprep.subr.bf16.mxu0 0
      %2156 = vmatpush1.bf16.msra.mxu0 %v2146
      %2157 = vmatprep.subr.bf16.mxu0 0
      %2158 = vmatpush1.bf16.msra.mxu0 %v2145
      %2159 = vmatprep.subr.bf16.mxu0 0
      %2160 = vmatpush1.bf16.msra.mxu0 %v2144
      %2161 = vmatprep.subr.bf16.mxu0 0
      %2162 = vmatpush1.bf16.msra.mxu0 %v2143
      %2163 = vmatprep.subr.bf16.mxu0 0
      %2164 = vmatpush1.bf16.msra.mxu0 %v2142
      %2165 = vmatprep.subr.bf16.mxu0 0
      %2166 = vmatpush1.bf16.msra.mxu0 %v2141
      %2167 = vmatprep.subr.bf16.mxu0 0
      %2168 = vmatpush1.bf16.msra.mxu0 %v2140
      %2169 = vmatprep.subr.bf16.mxu0 0
      %2170 = vmatpush1.bf16.msra.mxu0 %v2139
      %2171 = vmatprep.subr.bf16.mxu0 0
      %2172 = vmatpush2.bf16.msra.mxu0 0
      %2173 = vmatprep.subr.bf16.mxu0 0
      %2174 = vmatpush2.bf16.msra.mxu0 0
      %2175 = vmatprep.subr.bf16.mxu0 0
      %2176 = vmatpush2.bf16.msra.mxu0 0
      %2177 = vmatprep.subr.bf16.mxu0 0
      %2178 = vmatpush2.bf16.msra.mxu0 0
      %2179 = vmatprep.subr.bf16.mxu0 0
      %2180 = vmatpush2.bf16.msra.mxu0 0
      %2181 = vmatprep.subr.bf16.mxu0 0
      %2182 = vmatpush2.bf16.msra.mxu0 0
      %2183 = vmatprep.subr.bf16.mxu0 0
      %2184 = vmatpush2.bf16.msra.mxu0 0
      %2185 = vmatprep.subr.bf16.mxu0 0
      %2186 = vmatpush2.bf16.msra.mxu0 0
      %2187 = vmatprep.mubr.bf16.mxu0 0
      %2188 = vmatmul.mubr.bf16.gmra.mxu0 %v2076
      %v2189 = vpop.f32.mrf.mxu0
      %v2190 = vadd.f32 %v2105, %v2189
      %v2191 = vpop.f32.mrf.mxu0
      %v2192 = vpop.f32.mrf.mxu0
      %v2193 = vadd.f32 %v2105, %v2192
      %v2194 = vpop.f32.mrf.mxu0
      %2195 = vmatprep.mubr.bf16.mxu0 0
      %2196 = vmatmul.mubr.bf16.gmra.mxu0 %v2077
      %v2197 = vpop.f32.mrf.mxu0
      %v2198 = vadd.f32 %v2105, %v2197
      %v2199 = vpop.f32.mrf.mxu0
      %v2200 = vpop.f32.mrf.mxu0
      %v2201 = vadd.f32 %v2105, %v2200
      %v2202 = vpop.f32.mrf.mxu0
      %2203 = vmatprep.mubr.bf16.mxu0 0
      %2204 = vmatmul.mubr.bf16.gmra.mxu0 %v2078
      %v2205 = vpop.f32.mrf.mxu0
      %v2206 = vadd.f32 %v2105, %v2205
      %v2207 = vpop.f32.mrf.mxu0
      %v2208 = vpop.f32.mrf.mxu0
      %v2209 = vadd.f32 %v2105, %v2208
      %v2210 = vpop.f32.mrf.mxu0
      %2211 = vmatprep.mubr.bf16.mxu0 0
      %2212 = vmatmul.mubr.bf16.gmra.mxu0 %v2079
      %v2213 = vpop.f32.mrf.mxu0
      %v2214 = vadd.f32 %v2105, %v2213
      %v2215 = vpop.f32.mrf.mxu0
      %v2216 = vpop.f32.mrf.mxu0
      %v2217 = vadd.f32 %v2105, %v2216
      %v2218 = vpop.f32.mrf.mxu0
      %2219 = vmatprep.mubr.bf16.mxu0 0
      %2220 = vmatmul.mubr.bf16.gmra.mxu0 %v2080
      %v2221 = vpop.f32.mrf.mxu0
      %v2222 = vadd.f32 %v2105, %v2221
      %v2223 = vpop.f32.mrf.mxu0
      %v2224 = vpop.f32.mrf.mxu0
      %v2225 = vadd.f32 %v2105, %v2224
      %v2226 = vpop.f32.mrf.mxu0
      %2227 = vmatprep.mubr.bf16.mxu0 0
      %2228 = vmatmul.mubr.bf16.gmra.mxu0 %v2081
      %v2229 = vpop.f32.mrf.mxu0
      %v2230 = vadd.f32 %v2105, %v2229
      %v2231 = vpop.f32.mrf.mxu0
      %v2232 = vpop.f32.mrf.mxu0
      %v2233 = vadd.f32 %v2105, %v2232
      %v2234 = vpop.f32.mrf.mxu0
      %2235 = vmatprep.mubr.bf16.mxu0 0
      %2236 = vmatmul.mubr.bf16.gmra.mxu0 %v2082
      %v2237 = vpop.f32.mrf.mxu0
      %v2238 = vadd.f32 %v2105, %v2237
      %v2239 = vpop.f32.mrf.mxu0
      %v2240 = vpop.f32.mrf.mxu0
      %v2241 = vadd.f32 %v2105, %v2240
      %v2242 = vpop.f32.mrf.mxu0
      %2243 = vmatprep.mubr.bf16.mxu0 0
      %2244 = vmatmul.mubr.bf16.gmra.mxu0 %v2083
      %v2245 = vpop.f32.mrf.mxu0
      %v2246 = vadd.f32 %v2105, %v2245
      %v2247 = vpop.f32.mrf.mxu0
      %v2248 = vpop.f32.mrf.mxu0
      %v2249 = vadd.f32 %v2105, %v2248
      %v2250 = vpop.f32.mrf.mxu0
      %2251 = vdwg.mxu0
      %2252 = vst [vmem:[%s445] sm:$0xff] %v2190
      %2253 = vst [vmem:[%s445 + $0x8] sm:$0xff] %v2193
      %2254 = vst [vmem:[%s445 + $0x10] sm:$0xff] %v2198
      %2255 = vst [vmem:[%s445 + $0x18] sm:$0xff] %v2201
      %2256 = vst [vmem:[%s445 + $0x20] sm:$0xff] %v2206
      %2257 = vst [vmem:[%s445 + $0x28] sm:$0xff] %v2209
      %2258 = vst [vmem:[%s445 + $0x30] sm:$0xff] %v2214
      %2259 = vst [vmem:[%s445 + $0x38] sm:$0xff] %v2217
      %2260 = vst [vmem:[%s445 + $0x40] sm:$0xff] %v2222
      %2261 = vst [vmem:[%s445 + $0x48] sm:$0xff] %v2225
      %2262 = vst [vmem:[%s445 + $0x50] sm:$0xff] %v2230
      %2263 = vst [vmem:[%s445 + $0x58] sm:$0xff] %v2233
      %2264 = vst [vmem:[%s445 + $0x60] sm:$0xff] %v2238
      %2265 = vst [vmem:[%s445 + $0x68] sm:$0xff] %v2241
      %2266 = vst [vmem:[%s445 + $0x70] sm:$0xff] %v2246
      %2267 = vst [vmem:[%s445 + $0x78] sm:$0xff] %v2249
      %s2268 = smul.u32 %s22, 2
      %s2269 = sadd.s32 %s2268, %s23
      %s2270 = smul.u32 16, %s2269
      %p2271 = scmp.lt.s32.totalorder %s2270, 63
      %s2272 = scalar_select %p2271, %s2270, 63
      %s2273 = smul.addr %s2272, 8
      %s2274 = scalar_lea.vmem %s7, %s2273
      // Predicated region
      $region49: #{object_detection_forward.1} parent=47 // pred_check
        %p2275 = pneg %p230
      $region50: #{object_detection_forward.1} parent=47 // pred_check_branch
        %2277 = sbr.rel (%p2275) target = $region52
      $region51: #{object_detection_forward.1} parent=47 // pred_region
        %s2278 = smul.u32 %s22, 2
        %s2279 = sadd.s32 %s2278, %s23
        %s2280 = smul.u32 16, %s2279
      $region52: #{object_detection_forward.1} parent=47 // pred_fallthru
        _
    $region48: #{object_detection_forward.1} parent=5 // pred_fallthru
      _
    %p2281 = scmp.le.s32.totalorder 2, %s13
    // Predicated region
    $region53: #{object_detection_forward.1} parent=5 // pred_check
      %p2282 = pneg %p2281
    $region54: #{object_detection_forward.1} parent=5 // pred_check_branch
      %2284 = sbr.rel (%p2282) target = $region56
    $region55: #{object_detection_forward.1} parent=5 // pred_region
      %s2285 = ssub.s32 %s13, 2
      // Predicated region
      $region57: #{object_detection_forward.1} parent=55 // pred_check
        %p2286 = pneg %p236
      $region58: #{object_detection_forward.1} parent=55 // pred_check_branch
        %2288 = sbr.rel (%p2286) target = $region60
      $region59: #{object_detection_forward.1} parent=55 // pred_region
        %s2289 = smul.u32 %s24, 2
        %s2290 = sadd.s32 %s2289, %s25
        %s2291 = smul.u32 16, %s2290
        %p2292 = scmp.lt.s32.totalorder %s2291, 63
        %s2293 = scalar_select %p2292, %s2291, 63
        %s2294 = smul.addr %s2293, 8
        %s2295 = scalar_lea.vmem %s7, %s2294
      $region60: #{object_detection_forward.1} parent=55 // pred_fallthru
        _
    $region56: #{object_detection_forward.1} parent=5 // pred_fallthru
      _
  $region6: #{object_detection_forward.1} parent=0 // loop_footer
    %s17 = sadd.s32 1, %s13
  $region7: #{object_detection_forward.1} parent=0 // loop_footer_branch
    %12 = sbr.rel target = $region3
  $region8: #{object_detection_forward.1} parent=0 // loop_exit
    _

</llo_original>
